<compile_context>
chip_gen: v7x
topology: tpu7x:2x2x1
jax: 0.10.0
libtpu: 0.0.40
codegen_flags: <defaults>
</compile_context>

<pallas_src>
import jax
import jax.numpy as jnp
from jax.experimental import pallas as pl
from jax.experimental.pallas import tpu as pltpu

# ---- small config consistent with GPTLanguageModel's structure ---------------
VOCAB = 256          # vocab_size   (50257 in original)
N_EMBD = 128         # n_embd       (1536 in original)
N_HEAD = 4           # n_head       (24 in original)
HEAD_SIZE = N_EMBD // N_HEAD
N_LAYER = 2          # n_layer      (48 in original)
BLOCK_SIZE = 16      # block_size   (768 in original)
B = 2                # batch
T = 16               # sequence length (<= BLOCK_SIZE)
FF = 4 * N_EMBD      # FFN hidden
VOCAB_PAD = ((VOCAB + 127) // 128) * 128   # lane-dense lm_head tiles

_VMEM_LIMIT = 32 * 1024 * 1024   # explicit scoped-VMEM limit (v5e default is 16 MiB);
                                 # size to ~2x per-layer weight set at real config.


def _layernorm(x, w, b, eps=1e-5):
    """PyTorch nn.LayerNorm over last dim (biased variance, eps=1e-5). f32 math."""
    mu = jnp.mean(x, axis=-1, keepdims=True)
    xc = x - mu
    var = jnp.mean(xc * xc, axis=-1, keepdims=True)
    return xc * jax.lax.rsqrt(var + eps) * w + b


def _softmax_rows(s):
    """Row softmax; reciprocal goes to the EUP slot (approx=True)."""
    m = jnp.max(s, axis=-1, keepdims=True)
    e = jnp.exp(s - m)
    return e * pl.reciprocal(jnp.sum(e, axis=-1, keepdims=True), approx=True)


# ---------------------------------------------------------------------------
# Kernel 1: all transformer blocks.
# grid = (B, N_LAYER): batch axis is "parallel" (one sequence per step),
# layer axis is "arbitrary".  The (T, C) activation for the current sequence
# lives in VMEM scratch across the layer steps; the final block output is
# written out at the last layer step.
# ---------------------------------------------------------------------------
def block_kernel(x0_ref, bias_ref, vecs_ref, b1_ref, wqkv_ref, wproj_ref,
                 w1_ref, w2_ref, xout_ref, x_sc):
    layer = pl.program_id(1)

    # -- first layer of this sequence: load the embedding activation ----------
    @pl.when(layer == 0)
    def _():
        x_sc[...] = x0_ref[0]

    x = x_sc[...]                                   # (T, C) f32
    t, c = x.shape

    vecs = vecs_ref[0]                              # (8, C) f32
    ln1_w, ln1_b = vecs[0:1, :], vecs[1:2, :]
    ln2_w, ln2_b = vecs[2:3, :], vecs[3:4, :]
    b_proj, b_ff2 = vecs[4:5, :], vecs[5:6, :]
    b_ff1 = b1_ref[0]                               # (1, 4C) f32

    # -- self-attention: LN1 -> fused QKV -> per-head attn -> proj -> residual -
    xn = _layernorm(x, ln1_w, ln1_b).astype(jnp.bfloat16)
    qkv = jnp.dot(xn, wqkv_ref[0], preferred_element_type=jnp.float32)  # (T, 3C)

    scale = HEAD_SIZE ** -0.5
    q = (qkv[:, :c] * scale).astype(jnp.bfloat16)   # scale folded into q (T,C mul)
    kv = qkv[:, c:].astype(jnp.bfloat16)            # single cast for k|v
    k = kv[:, :c]
    v = kv[:, c:]

    bias = bias_ref[...]                            # (T, T) additive causal bias
    wproj = wproj_ref[0]                            # (C, C) bf16

    # accumulate per-head projected outputs directly (no lane-axis concat)
    attn = jnp.zeros((t, c), jnp.float32) + b_proj
    for h in range(N_HEAD):                         # static loop over heads
        s = slice(h * HEAD_SIZE, (h + 1) * HEAD_SIZE)
        wei = jax.lax.dot_general(q[:, s], k[:, s], (((1,), (1,)), ((), ())),
                                  preferred_element_type=jnp.float32) + bias
        p = _softmax_rows(wei).astype(jnp.bfloat16)
        # attention dropout -> identity in eval mode
        pv = jnp.dot(p, v[:, s], preferred_element_type=jnp.float32)   # (T, HS)
        attn = attn + jnp.dot(pv.astype(jnp.bfloat16), wproj[s, :],
                              preferred_element_type=jnp.float32)
    x = x + attn                                    # residual (f32)

    # -- feed-forward: LN2 -> W1 -> ReLU -> W2 -> residual ---------------------
    xn2 = _layernorm(x, ln2_w, ln2_b).astype(jnp.bfloat16)
    h1 = jnp.dot(xn2, w1_ref[0], preferred_element_type=jnp.float32) + b_ff1
    h1 = jnp.maximum(h1, 0.0).astype(jnp.bfloat16)  # ReLU
    ff = jnp.dot(h1, w2_ref[0], preferred_element_type=jnp.float32) + b_ff2
    # ffwd dropout -> identity in eval mode
    x = x + ff                                      # residual (f32)

    x_sc[...] = x

    # -- last layer: emit the block-stack output for this sequence -------------
    @pl.when(layer == pl.num_programs(1) - 1)
    def _():
        xout_ref[0] = x


# ---------------------------------------------------------------------------
# Kernel 2: final LayerNorm + lm_head, vocab-tiled.
# grid = (num_m_tiles, num_vocab_tiles).  ln_f(x) is computed once per M tile
# (vocab tile 0) into a bf16 scratch and reused for every vocab tile.
# ---------------------------------------------------------------------------
def lm_head_kernel(x_ref, lnf_ref, wlm_ref, blm_ref, logits_ref, xn_sc):
    @pl.when(pl.program_id(1) == 0)
    def _():
        lnf = lnf_ref[...]                          # row0 = weight, row1 = bias
        xn_sc[...] = _layernorm(x_ref[...], lnf[0:1, :], lnf[1:2, :]
                                ).astype(jnp.bfloat16)
    logits_ref[...] = jnp.dot(xn_sc[...], wlm_ref[...],
                              preferred_element_type=jnp.float32) + blm_ref[...]


# ---------------------------------------------------------------------------
# Parameter init (mirrors GPTLanguageModel._init_weights: normal(0, 0.02) for
# Linear/Embedding weights, zeros for biases, LayerNorm = (ones, zeros)).
# Matmul weights are stored in bf16 (MXU-native); vectors/embeddings in f32.
# ---------------------------------------------------------------------------
def init_params(key):
    kiter = iter(jax.random.split(key, 3 + 4 * N_LAYER))

    def nrm(shape, dtype=jnp.float32):
        return (0.02 * jax.random.normal(next(kiter), shape, jnp.float32)).astype(dtype)

    tok_emb = nrm((VOCAB, N_EMBD))
    pos_emb = nrm((BLOCK_SIZE, N_EMBD))
    w_lm = nrm((N_EMBD, VOCAB), jnp.bfloat16)
    if VOCAB_PAD != VOCAB:
        w_lm = jnp.pad(w_lm, ((0, 0), (0, VOCAB_PAD - VOCAB)))

    wqkv, wproj, w1, w2 = [], [], [], []
    for _ in range(N_LAYER):
        wqkv.append(nrm((N_EMBD, 3 * N_EMBD), jnp.bfloat16))   # fused Wq|Wk|Wv
        wproj.append(nrm((N_EMBD, N_EMBD), jnp.bfloat16))
        w1.append(nrm((N_EMBD, FF), jnp.bfloat16))
        w2.append(nrm((FF, N_EMBD), jnp.bfloat16))

    # packed per-layer vectors: [ln1_w, ln1_b, ln2_w, ln2_b, b_proj, b_ff2, pad, pad]
    vec = jnp.zeros((8, N_EMBD), jnp.float32).at[0].set(1.0).at[2].set(1.0)

    return {
        "tok_emb": tok_emb,
        "pos_emb": pos_emb,
        "vecs": jnp.stack([vec] * N_LAYER),                    # (L, 8, C)
        "b1": jnp.zeros((N_LAYER, 1, FF), jnp.float32),        # FFN bias 1
        "wqkv": jnp.stack(wqkv),                               # (L, C, 3C) bf16
        "wproj": jnp.stack(wproj),                             # (L, C, C)  bf16
        "w1": jnp.stack(w1),                                   # (L, C, 4C) bf16
        "w2": jnp.stack(w2),                                   # (L, 4C, C) bf16
        "lnf": jnp.zeros((8, N_EMBD), jnp.float32).at[0].set(1.0),  # row0=w, row1=b
        "w_lm": w_lm,                                          # (C, VOCAB_PAD) bf16
        "b_lm": jnp.zeros((1, VOCAB_PAD), jnp.float32),
    }


def gpt_forward(idx, params):
    """Equivalent of GPTLanguageModel.forward(idx, targets=None) -> (logits, None)."""
    b, t = idx.shape
    assert t <= BLOCK_SIZE and t % 8 == 0
    c = N_EMBD

    # embedding gather + position add stay as XLA glue (outside the kernel)
    tok = jnp.take(params["tok_emb"], idx.reshape(-1), axis=0).reshape(b, t, c)
    x0 = tok + params["pos_emb"][None, :t, :]                  # (B, T, C) f32

    # causal additive bias built once (not rebuilt per layer inside the kernel)
    row = jnp.arange(t)[:, None]
    col = jnp.arange(t)[None, :]
    causal_bias = jnp.where(row >= col, 0.0, -1e30).astype(jnp.float32)  # (T, T)

    # ---- kernel 1: transformer blocks, grid = (batch, layer) -----------------
    x_out = pl.pallas_call(
        block_kernel,
        out_shape=jax.ShapeDtypeStruct((b, t, c), jnp.float32),
        grid=(b, N_LAYER),
        in_specs=[
            pl.BlockSpec((1, t, c), lambda bb, l: (bb, 0, 0)),       # x0 (per sequence)
            pl.BlockSpec((t, t), lambda bb, l: (0, 0)),              # causal bias
            pl.BlockSpec((1, 8, c), lambda bb, l: (l, 0, 0)),        # packed LN/bias vecs
            pl.BlockSpec((1, 1, FF), lambda bb, l: (l, 0, 0)),       # FFN bias 1
            pl.BlockSpec((1, c, 3 * c), lambda bb, l: (l, 0, 0)),    # fused Wqkv
            pl.BlockSpec((1, c, c), lambda bb, l: (l, 0, 0)),        # Wproj
            pl.BlockSpec((1, c, FF), lambda bb, l: (l, 0, 0)),       # W1
            pl.BlockSpec((1, FF, c), lambda bb, l: (l, 0, 0)),       # W2
        ],
        out_specs=pl.BlockSpec((1, t, c), lambda bb, l: (bb, 0, 0)),
        scratch_shapes=[pltpu.VMEM((t, c), jnp.float32)],            # resident activation
        compiler_params=pltpu.CompilerParams(
            dimension_semantics=("parallel", "arbitrary"),
            vmem_limit_bytes=_VMEM_LIMIT),
    )(x0, causal_bias, params["vecs"], params["b1"], params["wqkv"],
      params["wproj"], params["w1"], params["w2"])

    # ---- kernel 2: final LayerNorm + lm_head (vocab tiled) --------------------
    m = b * t
    x_flat = x_out.reshape(m, c)
    tv = 128
    nv = VOCAB_PAD // tv
    logits_flat = pl.pallas_call(
        lm_head_kernel,
        out_shape=jax.ShapeDtypeStruct((m, VOCAB_PAD), jnp.float32),
        grid=(1, nv),
        in_specs=[
            pl.BlockSpec((m, c), lambda mi, vi: (mi, 0)),            # block-stack output
            pl.BlockSpec((8, c), lambda mi, vi: (0, 0)),             # ln_f params
            pl.BlockSpec((c, tv), lambda mi, vi: (0, vi)),           # lm_head W tile
            pl.BlockSpec((1, tv), lambda mi, vi: (0, vi)),           # lm_head b tile
        ],
        out_specs=pl.BlockSpec((m, tv), lambda mi, vi: (mi, vi)),
        scratch_shapes=[pltpu.VMEM((m, c), jnp.bfloat16)],           # ln_f(x), reused
        compiler_params=pltpu.CompilerParams(
            dimension_semantics=("parallel", "arbitrary"),
            vmem_limit_bytes=_VMEM_LIMIT),
    )(x_flat, params["lnf"], params["w_lm"], params["b_lm"])

    logits = logits_flat[:, :VOCAB].reshape(b, t, VOCAB)
    # TODO(synk): cross-entropy loss path (targets is not None) not implemented; forward-only.
    return logits, None


if __name__ == "__main__":
    key = jax.random.PRNGKey(0)
    pkey, ikey = jax.random.split(key)
    params = init_params(pkey)
    idx = jax.random.randint(ikey, (B, T), 0, VOCAB, dtype=jnp.int32)

    logits, loss = gpt_forward(idx, params)
    logits = jax.block_until_ready(logits)

    assert logits.shape == (B, T, VOCAB), logits.shape
    assert loss is None
    assert bool(jnp.all(jnp.isfinite(logits)))
    print("KERNEL_OK")
</pallas_src>

<mosaic_0001>
module attributes {stable_mosaic.version = 11 : i64} {
  func.func @block_kernel(%arg0: i32, %arg1: i32, %arg2: memref<1x16x128xf32, #tpu.memory_space<vmem>>, %arg3: memref<16x16xf32, #tpu.memory_space<vmem>>, %arg4: memref<1x8x128xf32, #tpu.memory_space<vmem>>, %arg5: memref<1x1x512xf32, #tpu.memory_space<vmem>>, %arg6: memref<1x128x384xbf16, #tpu.memory_space<vmem>>, %arg7: memref<1x128x128xbf16, #tpu.memory_space<vmem>>, %arg8: memref<1x128x512xbf16, #tpu.memory_space<vmem>>, %arg9: memref<1x512x128xbf16, #tpu.memory_space<vmem>>, %arg10: memref<1x16x128xf32, #tpu.memory_space<vmem>>, %arg11: memref<16x128xf32, #tpu.memory_space<vmem>>) attributes {dimension_semantics = [#tpu.dimension_semantics<parallel>, #tpu.dimension_semantics<arbitrary>], iteration_bounds = array<i64: 2, 2>, scalar_prefetch = 0 : i64, scratch_operands = 1 : i64, tpu.core_type = #tpu.core_type<tc>, window_params = [{transform_indices = @transform_0, window_bounds = array<i64: 1, 16, 128>}, {pipeline_mode = #tpu.pipeline_mode<synchronous>, transform_indices = @transform_1, window_bounds = array<i64: 16, 16>}, {transform_indices = @transform_2, window_bounds = array<i64: 1, 8, 128>}, {transform_indices = @transform_3, window_bounds = array<i64: 1, 1, 512>}, {transform_indices = @transform_4, window_bounds = array<i64: 1, 128, 384>}, {transform_indices = @transform_5, window_bounds = array<i64: 1, 128, 128>}, {transform_indices = @transform_6, window_bounds = array<i64: 1, 128, 512>}, {transform_indices = @transform_7, window_bounds = array<i64: 1, 512, 128>}, {transform_indices = @transform_8, window_bounds = array<i64: 1, 16, 128>}]} {
    %c0_i32 = arith.constant 0 : i32
    %0 = arith.cmpi eq, %arg1, %c0_i32 : i32
    %1 = arith.extui %0 : i1 to i32
    %c0_i32_0 = arith.constant 0 : i32
    %2 = arith.cmpi ne, %1, %c0_i32_0 : i32
    scf.if %2 {
      %c0_60 = arith.constant 0 : index
      %c0_61 = arith.constant 0 : index
      %c0_62 = arith.constant 0 : index
      %176 = vector.load %arg2[%c0_60, %c0_61, %c0_62] : memref<1x16x128xf32, #tpu.memory_space<vmem>>, vector<1x16x128xf32>
      %177 = vector.shape_cast %176 : vector<1x16x128xf32> to vector<16x128xf32>
      %c0_63 = arith.constant 0 : index
      %c0_64 = arith.constant 0 : index
      %178 = vector.load %arg11[%c0_63, %c0_64] : memref<16x128xf32, #tpu.memory_space<vmem>>, vector<16x128xf32>
      tpu.vector_store %arg11[%c0_63, %c0_64], %177 {strides = array<i32>} : memref<16x128xf32, #tpu.memory_space<vmem>>, vector<16x128xf32>,
    } else {
    }
    %c0 = arith.constant 0 : index
    %c0_1 = arith.constant 0 : index
    %3 = vector.load %arg11[%c0, %c0_1] : memref<16x128xf32, #tpu.memory_space<vmem>>, vector<16x128xf32>
    %c0_2 = arith.constant 0 : index
    %c0_3 = arith.constant 0 : index
    %c0_4 = arith.constant 0 : index
    %4 = vector.load %arg4[%c0_2, %c0_3, %c0_4] : memref<1x8x128xf32, #tpu.memory_space<vmem>>, vector<1x8x128xf32>
    %5 = vector.shape_cast %4 : vector<1x8x128xf32> to vector<8x128xf32>
    %6 = vector.extract_strided_slice %5 {offsets = [0, 0], sizes = [1, 128], strides = [1, 1]} : vector<8x128xf32> to vector<1x128xf32>
    %7 = vector.extract_strided_slice %5 {offsets = [1, 0], sizes = [1, 128], strides = [1, 1]} : vector<8x128xf32> to vector<1x128xf32>
    %8 = vector.extract_strided_slice %5 {offsets = [2, 0], sizes = [1, 128], strides = [1, 1]} : vector<8x128xf32> to vector<1x128xf32>
    %9 = vector.extract_strided_slice %5 {offsets = [3, 0], sizes = [1, 128], strides = [1, 1]} : vector<8x128xf32> to vector<1x128xf32>
    %10 = vector.extract_strided_slice %5 {offsets = [4, 0], sizes = [1, 128], strides = [1, 1]} : vector<8x128xf32> to vector<1x128xf32>
    %11 = vector.extract_strided_slice %5 {offsets = [5, 0], sizes = [1, 128], strides = [1, 1]} : vector<8x128xf32> to vector<1x128xf32>
    %c0_5 = arith.constant 0 : index
    %c0_6 = arith.constant 0 : index
    %c0_7 = arith.constant 0 : index
    %12 = vector.load %arg5[%c0_5, %c0_6, %c0_7] : memref<1x1x512xf32, #tpu.memory_space<vmem>>, vector<1x1x512xf32>
    %13 = vector.shape_cast %12 : vector<1x1x512xf32> to vector<1x512xf32>
    %cst = arith.constant dense<0.000000e+00> : vector<16xf32>
    %14 = vector.multi_reduction <add>, %3, %cst [1] : vector<16x128xf32> to vector<16xf32>
    %15 = vector.shape_cast %14 : vector<16xf32> to vector<16x1xf32>
    %cst_8 = arith.constant 1.280000e+02 : f32
    %16 = vector.broadcast %cst_8 : f32 to vector<16x1xf32>
    %17 = arith.divf %15, %16 : vector<16x1xf32>
    %18 = vector.broadcast %17 : vector<16x1xf32> to vector<16x128xf32>
    %19 = arith.subf %3, %18 : vector<16x128xf32>
    %20 = arith.mulf %19, %19 : vector<16x128xf32>
    %cst_9 = arith.constant dense<0.000000e+00> : vector<16xf32>
    %21 = vector.multi_reduction <add>, %20, %cst_9 [1] : vector<16x128xf32> to vector<16xf32>
    %22 = vector.shape_cast %21 : vector<16xf32> to vector<16x1xf32>
    %cst_10 = arith.constant 1.280000e+02 : f32
    %23 = vector.broadcast %cst_10 : f32 to vector<16x1xf32>
    %24 = arith.divf %22, %23 : vector<16x1xf32>
    %cst_11 = arith.constant 9.99999974E-6 : f32
    %25 = vector.broadcast %cst_11 : f32 to vector<16x1xf32>
    %26 = arith.addf %24, %25 : vector<16x1xf32>
    %27 = math.rsqrt %26 : vector<16x1xf32>
    %28 = vector.broadcast %27 : vector<16x1xf32> to vector<16x128xf32>
    %29 = arith.mulf %19, %28 : vector<16x128xf32>
    %30 = vector.broadcast %6 : vector<1x128xf32> to vector<16x128xf32>
    %31 = arith.mulf %29, %30 : vector<16x128xf32>
    %32 = vector.broadcast %7 : vector<1x128xf32> to vector<16x128xf32>
    %33 = arith.addf %31, %32 : vector<16x128xf32>
    %34 = arith.truncf %33 : vector<16x128xf32> to vector<16x128xbf16>
    %c0_12 = arith.constant 0 : index
    %c0_13 = arith.constant 0 : index
    %c0_14 = arith.constant 0 : index
    %35 = vector.load %arg6[%c0_12, %c0_13, %c0_14] : memref<1x128x384xbf16, #tpu.memory_space<vmem>>, vector<1x128x384xbf16>
    %36 = vector.shape_cast %35 : vector<1x128x384xbf16> to vector<128x384xbf16>
    %cst_15 = arith.constant dense<0.000000e+00> : vector<16x384xf32>
    %37 = tpu.matmul %34, %36, %cst_15 {dimension_numbers = #tpu.dot_dimension_numbers<[1], [0], [0], [1], [0, 0, 1, 1], [], []>} : vector<16x128xbf16>, vector<128x384xbf16>, vector<16x384xf32> -> vector<16x384xf32>
    %38 = vector.extract_strided_slice %37 {offsets = [0, 0], sizes = [16, 128], strides = [1, 1]} : vector<16x384xf32> to vector<16x128xf32>
    %cst_16 = arith.constant 0.176776692 : f32
    %39 = vector.broadcast %cst_16 : f32 to vector<16x128xf32>
    %40 = arith.mulf %38, %39 : vector<16x128xf32>
    %41 = arith.truncf %40 : vector<16x128xf32> to vector<16x128xbf16>
    %42 = vector.extract_strided_slice %37 {offsets = [0, 128], sizes = [16, 256], strides = [1, 1]} : vector<16x384xf32> to vector<16x256xf32>
    %43 = arith.truncf %42 : vector<16x256xf32> to vector<16x256xbf16>
    %44 = vector.extract_strided_slice %43 {offsets = [0, 0], sizes = [16, 128], strides = [1, 1]} : vector<16x256xbf16> to vector<16x128xbf16>
    %45 = vector.extract_strided_slice %43 {offsets = [0, 128], sizes = [16, 128], strides = [1, 1]} : vector<16x256xbf16> to vector<16x128xbf16>
    %c0_17 = arith.constant 0 : index
    %c0_18 = arith.constant 0 : index
    %46 = vector.load %arg3[%c0_17, %c0_18] : memref<16x16xf32, #tpu.memory_space<vmem>>, vector<16x16xf32>
    %c0_19 = arith.constant 0 : index
    %c0_20 = arith.constant 0 : index
    %c0_21 = arith.constant 0 : index
    %47 = vector.load %arg7[%c0_19, %c0_20, %c0_21] : memref<1x128x128xbf16, #tpu.memory_space<vmem>>, vector<1x128x128xbf16>
    %48 = vector.shape_cast %47 : vector<1x128x128xbf16> to vector<128x128xbf16>
    %cst_22 = arith.constant 0.000000e+00 : f32
    %49 = vector.broadcast %cst_22 : f32 to vector<16x128xf32>
    %50 = vector.broadcast %10 : vector<1x128xf32> to vector<16x128xf32>
    %51 = arith.addf %49, %50 : vector<16x128xf32>
    %52 = vector.extract_strided_slice %41 {offsets = [0, 0], sizes = [16, 32], strides = [1, 1]} : vector<16x128xbf16> to vector<16x32xbf16>
    %53 = vector.extract_strided_slice %44 {offsets = [0, 0], sizes = [16, 32], strides = [1, 1]} : vector<16x128xbf16> to vector<16x32xbf16>
    %cst_23 = arith.constant dense<0.000000e+00> : vector<16x16xf32>
    %54 = tpu.matmul %52, %53, %cst_23 {dimension_numbers = #tpu.dot_dimension_numbers<[1], [1], [0], [0], [0, 0, 1, 0], [], []>} : vector<16x32xbf16>, vector<16x32xbf16>, vector<16x16xf32> -> vector<16x16xf32>
    %55 = arith.addf %54, %46 : vector<16x16xf32>
    %cst_24 = arith.constant dense<0xFF800000> : vector<16xf32>
    %56 = vector.multi_reduction <maximumf>, %55, %cst_24 [1] : vector<16x16xf32> to vector<16xf32>
    %57 = vector.shape_cast %56 : vector<16xf32> to vector<16x1xf32>
    %58 = vector.broadcast %57 : vector<16x1xf32> to vector<16x16xf32>
    %59 = arith.subf %55, %58 : vector<16x16xf32>
    %60 = math.exp %59 : vector<16x16xf32>
    %cst_25 = arith.constant dense<0.000000e+00> : vector<16xf32>
    %61 = vector.multi_reduction <add>, %60, %cst_25 [1] : vector<16x16xf32> to vector<16xf32>
    %62 = vector.shape_cast %61 : vector<16xf32> to vector<16x1xf32>
    %63 = tpu.reciprocal %62 {approx = true} : vector<16x1xf32> -> vector<16x1xf32>
    %64 = vector.broadcast %63 : vector<16x1xf32> to vector<16x16xf32>
    %65 = arith.mulf %60, %64 : vector<16x16xf32>
    %66 = arith.truncf %65 : vector<16x16xf32> to vector<16x16xbf16>
    %67 = vector.extract_strided_slice %45 {offsets = [0, 0], sizes = [16, 32], strides = [1, 1]} : vector<16x128xbf16> to vector<16x32xbf16>
    %cst_26 = arith.constant dense<0.000000e+00> : vector<16x32xf32>
    %68 = tpu.matmul %66, %67, %cst_26 {dimension_numbers = #tpu.dot_dimension_numbers<[1], [0], [0], [1], [0, 0, 1, 1], [], []>} : vector<16x16xbf16>, vector<16x32xbf16>, vector<16x32xf32> -> vector<16x32xf32>
    %69 = arith.truncf %68 : vector<16x32xf32> to vector<16x32xbf16>
    %70 = vector.extract_strided_slice %48 {offsets = [0, 0], sizes = [32, 128], strides = [1, 1]} : vector<128x128xbf16> to vector<32x128xbf16>
    %cst_27 = arith.constant dense<0.000000e+00> : vector<16x128xf32>
    %71 = tpu.matmul %69, %70, %cst_27 {dimension_numbers = #tpu.dot_dimension_numbers<[1], [0], [0], [1], [0, 0, 1, 1], [], []>} : vector<16x32xbf16>, vector<32x128xbf16>, vector<16x128xf32> -> vector<16x128xf32>
    %72 = arith.addf %51, %71 : vector<16x128xf32>
    %73 = vector.extract_strided_slice %41 {offsets = [0, 32], sizes = [16, 32], strides = [1, 1]} : vector<16x128xbf16> to vector<16x32xbf16>
    %74 = vector.extract_strided_slice %44 {offsets = [0, 32], sizes = [16, 32], strides = [1, 1]} : vector<16x128xbf16> to vector<16x32xbf16>
    %cst_28 = arith.constant dense<0.000000e+00> : vector<16x16xf32>
    %75 = tpu.matmul %73, %74, %cst_28 {dimension_numbers = #tpu.dot_dimension_numbers<[1], [1], [0], [0], [0, 0, 1, 0], [], []>} : vector<16x32xbf16>, vector<16x32xbf16>, vector<16x16xf32> -> vector<16x16xf32>
    %76 = arith.addf %75, %46 : vector<16x16xf32>
    %cst_29 = arith.constant dense<0xFF800000> : vector<16xf32>
    %77 = vector.multi_reduction <maximumf>, %76, %cst_29 [1] : vector<16x16xf32> to vector<16xf32>
    %78 = vector.shape_cast %77 : vector<16xf32> to vector<16x1xf32>
    %79 = vector.broadcast %78 : vector<16x1xf32> to vector<16x16xf32>
    %80 = arith.subf %76, %79 : vector<16x16xf32>
    %81 = math.exp %80 : vector<16x16xf32>
    %cst_30 = arith.constant dense<0.000000e+00> : vector<16xf32>
    %82 = vector.multi_reduction <add>, %81, %cst_30 [1] : vector<16x16xf32> to vector<16xf32>
    %83 = vector.shape_cast %82 : vector<16xf32> to vector<16x1xf32>
    %84 = tpu.reciprocal %83 {approx = true} : vector<16x1xf32> -> vector<16x1xf32>
    %85 = vector.broadcast %84 : vector<16x1xf32> to vector<16x16xf32>
    %86 = arith.mulf %81, %85 : vector<16x16xf32>
    %87 = arith.truncf %86 : vector<16x16xf32> to vector<16x16xbf16>
    %88 = vector.extract_strided_slice %45 {offsets = [0, 32], sizes = [16, 32], strides = [1, 1]} : vector<16x128xbf16> to vector<16x32xbf16>
    %cst_31 = arith.constant dense<0.000000e+00> : vector<16x32xf32>
    %89 = tpu.matmul %87, %88, %cst_31 {dimension_numbers = #tpu.dot_dimension_numbers<[1], [0], [0], [1], [0, 0, 1, 1], [], []>} : vector<16x16xbf16>, vector<16x32xbf16>, vector<16x32xf32> -> vector<16x32xf32>
    %90 = arith.truncf %89 : vector<16x32xf32> to vector<16x32xbf16>
    %91 = vector.extract_strided_slice %48 {offsets = [32, 0], sizes = [32, 128], strides = [1, 1]} : vector<128x128xbf16> to vector<32x128xbf16>
    %cst_32 = arith.constant dense<0.000000e+00> : vector<16x128xf32>
    %92 = tpu.matmul %90, %91, %cst_32 {dimension_numbers = #tpu.dot_dimension_numbers<[1], [0], [0], [1], [0, 0, 1, 1], [], []>} : vector<16x32xbf16>, vector<32x128xbf16>, vector<16x128xf32> -> vector<16x128xf32>
    %93 = arith.addf %72, %92 : vector<16x128xf32>
    %94 = vector.extract_strided_slice %41 {offsets = [0, 64], sizes = [16, 32], strides = [1, 1]} : vector<16x128xbf16> to vector<16x32xbf16>
    %95 = vector.extract_strided_slice %44 {offsets = [0, 64], sizes = [16, 32], strides = [1, 1]} : vector<16x128xbf16> to vector<16x32xbf16>
    %cst_33 = arith.constant dense<0.000000e+00> : vector<16x16xf32>
    %96 = tpu.matmul %94, %95, %cst_33 {dimension_numbers = #tpu.dot_dimension_numbers<[1], [1], [0], [0], [0, 0, 1, 0], [], []>} : vector<16x32xbf16>, vector<16x32xbf16>, vector<16x16xf32> -> vector<16x16xf32>
    %97 = arith.addf %96, %46 : vector<16x16xf32>
    %cst_34 = arith.constant dense<0xFF800000> : vector<16xf32>
    %98 = vector.multi_reduction <maximumf>, %97, %cst_34 [1] : vector<16x16xf32> to vector<16xf32>
    %99 = vector.shape_cast %98 : vector<16xf32> to vector<16x1xf32>
    %100 = vector.broadcast %99 : vector<16x1xf32> to vector<16x16xf32>
    %101 = arith.subf %97, %100 : vector<16x16xf32>
    %102 = math.exp %101 : vector<16x16xf32>
    %cst_35 = arith.constant dense<0.000000e+00> : vector<16xf32>
    %103 = vector.multi_reduction <add>, %102, %cst_35 [1] : vector<16x16xf32> to vector<16xf32>
    %104 = vector.shape_cast %103 : vector<16xf32> to vector<16x1xf32>
    %105 = tpu.reciprocal %104 {approx = true} : vector<16x1xf32> -> vector<16x1xf32>
    %106 = vector.broadcast %105 : vector<16x1xf32> to vector<16x16xf32>
    %107 = arith.mulf %102, %106 : vector<16x16xf32>
    %108 = arith.truncf %107 : vector<16x16xf32> to vector<16x16xbf16>
    %109 = vector.extract_strided_slice %45 {offsets = [0, 64], sizes = [16, 32], strides = [1, 1]} : vector<16x128xbf16> to vector<16x32xbf16>
    %cst_36 = arith.constant dense<0.000000e+00> : vector<16x32xf32>
    %110 = tpu.matmul %108, %109, %cst_36 {dimension_numbers = #tpu.dot_dimension_numbers<[1], [0], [0], [1], [0, 0, 1, 1], [], []>} : vector<16x16xbf16>, vector<16x32xbf16>, vector<16x32xf32> -> vector<16x32xf32>
    %111 = arith.truncf %110 : vector<16x32xf32> to vector<16x32xbf16>
    %112 = vector.extract_strided_slice %48 {offsets = [64, 0], sizes = [32, 128], strides = [1, 1]} : vector<128x128xbf16> to vector<32x128xbf16>
    %cst_37 = arith.constant dense<0.000000e+00> : vector<16x128xf32>
    %113 = tpu.matmul %111, %112, %cst_37 {dimension_numbers = #tpu.dot_dimension_numbers<[1], [0], [0], [1], [0, 0, 1, 1], [], []>} : vector<16x32xbf16>, vector<32x128xbf16>, vector<16x128xf32> -> vector<16x128xf32>
    %114 = arith.addf %93, %113 : vector<16x128xf32>
    %115 = vector.extract_strided_slice %41 {offsets = [0, 96], sizes = [16, 32], strides = [1, 1]} : vector<16x128xbf16> to vector<16x32xbf16>
    %116 = vector.extract_strided_slice %44 {offsets = [0, 96], sizes = [16, 32], strides = [1, 1]} : vector<16x128xbf16> to vector<16x32xbf16>
    %cst_38 = arith.constant dense<0.000000e+00> : vector<16x16xf32>
    %117 = tpu.matmul %115, %116, %cst_38 {dimension_numbers = #tpu.dot_dimension_numbers<[1], [1], [0], [0], [0, 0, 1, 0], [], []>} : vector<16x32xbf16>, vector<16x32xbf16>, vector<16x16xf32> -> vector<16x16xf32>
    %118 = arith.addf %117, %46 : vector<16x16xf32>
    %cst_39 = arith.constant dense<0xFF800000> : vector<16xf32>
    %119 = vector.multi_reduction <maximumf>, %118, %cst_39 [1] : vector<16x16xf32> to vector<16xf32>
    %120 = vector.shape_cast %119 : vector<16xf32> to vector<16x1xf32>
    %121 = vector.broadcast %120 : vector<16x1xf32> to vector<16x16xf32>
    %122 = arith.subf %118, %121 : vector<16x16xf32>
    %123 = math.exp %122 : vector<16x16xf32>
    %cst_40 = arith.constant dense<0.000000e+00> : vector<16xf32>
    %124 = vector.multi_reduction <add>, %123, %cst_40 [1] : vector<16x16xf32> to vector<16xf32>
    %125 = vector.shape_cast %124 : vector<16xf32> to vector<16x1xf32>
    %126 = tpu.reciprocal %125 {approx = true} : vector<16x1xf32> -> vector<16x1xf32>
    %127 = vector.broadcast %126 : vector<16x1xf32> to vector<16x16xf32>
    %128 = arith.mulf %123, %127 : vector<16x16xf32>
    %129 = arith.truncf %128 : vector<16x16xf32> to vector<16x16xbf16>
    %130 = vector.extract_strided_slice %45 {offsets = [0, 96], sizes = [16, 32], strides = [1, 1]} : vector<16x128xbf16> to vector<16x32xbf16>
    %cst_41 = arith.constant dense<0.000000e+00> : vector<16x32xf32>
    %131 = tpu.matmul %129, %130, %cst_41 {dimension_numbers = #tpu.dot_dimension_numbers<[1], [0], [0], [1], [0, 0, 1, 1], [], []>} : vector<16x16xbf16>, vector<16x32xbf16>, vector<16x32xf32> -> vector<16x32xf32>
    %132 = arith.truncf %131 : vector<16x32xf32> to vector<16x32xbf16>
    %133 = vector.extract_strided_slice %48 {offsets = [96, 0], sizes = [32, 128], strides = [1, 1]} : vector<128x128xbf16> to vector<32x128xbf16>
    %cst_42 = arith.constant dense<0.000000e+00> : vector<16x128xf32>
    %134 = tpu.matmul %132, %133, %cst_42 {dimension_numbers = #tpu.dot_dimension_numbers<[1], [0], [0], [1], [0, 0, 1, 1], [], []>} : vector<16x32xbf16>, vector<32x128xbf16>, vector<16x128xf32> -> vector<16x128xf32>
    %135 = arith.addf %114, %134 : vector<16x128xf32>
    %136 = arith.addf %3, %135 : vector<16x128xf32>
    %cst_43 = arith.constant dense<0.000000e+00> : vector<16xf32>
    %137 = vector.multi_reduction <add>, %136, %cst_43 [1] : vector<16x128xf32> to vector<16xf32>
    %138 = vector.shape_cast %137 : vector<16xf32> to vector<16x1xf32>
    %cst_44 = arith.constant 1.280000e+02 : f32
    %139 = vector.broadcast %cst_44 : f32 to vector<16x1xf32>
    %140 = arith.divf %138, %139 : vector<16x1xf32>
    %141 = vector.broadcast %140 : vector<16x1xf32> to vector<16x128xf32>
    %142 = arith.subf %136, %141 : vector<16x128xf32>
    %143 = arith.mulf %142, %142 : vector<16x128xf32>
    %cst_45 = arith.constant dense<0.000000e+00> : vector<16xf32>
    %144 = vector.multi_reduction <add>, %143, %cst_45 [1] : vector<16x128xf32> to vector<16xf32>
    %145 = vector.shape_cast %144 : vector<16xf32> to vector<16x1xf32>
    %cst_46 = arith.constant 1.280000e+02 : f32
    %146 = vector.broadcast %cst_46 : f32 to vector<16x1xf32>
    %147 = arith.divf %145, %146 : vector<16x1xf32>
    %cst_47 = arith.constant 9.99999974E-6 : f32
    %148 = vector.broadcast %cst_47 : f32 to vector<16x1xf32>
    %149 = arith.addf %147, %148 : vector<16x1xf32>
    %150 = math.rsqrt %149 : vector<16x1xf32>
    %151 = vector.broadcast %150 : vector<16x1xf32> to vector<16x128xf32>
    %152 = arith.mulf %142, %151 : vector<16x128xf32>
    %153 = vector.broadcast %8 : vector<1x128xf32> to vector<16x128xf32>
    %154 = arith.mulf %152, %153 : vector<16x128xf32>
    %155 = vector.broadcast %9 : vector<1x128xf32> to vector<16x128xf32>
    %156 = arith.addf %154, %155 : vector<16x128xf32>
    %157 = arith.truncf %156 : vector<16x128xf32> to vector<16x128xbf16>
    %c0_48 = arith.constant 0 : index
    %c0_49 = arith.constant 0 : index
    %c0_50 = arith.constant 0 : index
    %158 = vector.load %arg8[%c0_48, %c0_49, %c0_50] : memref<1x128x512xbf16, #tpu.memory_space<vmem>>, vector<1x128x512xbf16>
    %159 = vector.shape_cast %158 : vector<1x128x512xbf16> to vector<128x512xbf16>
    %cst_51 = arith.constant dense<0.000000e+00> : vector<16x512xf32>
    %160 = tpu.matmul %157, %159, %cst_51 {dimension_numbers = #tpu.dot_dimension_numbers<[1], [0], [0], [1], [0, 0, 1, 1], [], []>} : vector<16x128xbf16>, vector<128x512xbf16>, vector<16x512xf32> -> vector<16x512xf32>
    %161 = vector.broadcast %13 : vector<1x512xf32> to vector<16x512xf32>
    %162 = arith.addf %160, %161 : vector<16x512xf32>
    %cst_52 = arith.constant 0.000000e+00 : f32
    %163 = vector.broadcast %cst_52 : f32 to vector<16x512xf32>
    %164 = arith.maximumf %162, %163 : vector<16x512xf32>
    %165 = arith.truncf %164 : vector<16x512xf32> to vector<16x512xbf16>
    %c0_53 = arith.constant 0 : index
    %c0_54 = arith.constant 0 : index
    %c0_55 = arith.constant 0 : index
    %166 = vector.load %arg9[%c0_53, %c0_54, %c0_55] : memref<1x512x128xbf16, #tpu.memory_space<vmem>>, vector<1x512x128xbf16>
    %167 = vector.shape_cast %166 : vector<1x512x128xbf16> to vector<512x128xbf16>
    %cst_56 = arith.constant dense<0.000000e+00> : vector<16x128xf32>
    %168 = tpu.matmul %165, %167, %cst_56 {dimension_numbers = #tpu.dot_dimension_numbers<[1], [0], [0], [1], [0, 0, 1, 1], [], []>} : vector<16x512xbf16>, vector<512x128xbf16>, vector<16x128xf32> -> vector<16x128xf32>
    %169 = vector.broadcast %11 : vector<1x128xf32> to vector<16x128xf32>
    %170 = arith.addf %168, %169 : vector<16x128xf32>
    %171 = arith.addf %136, %170 : vector<16x128xf32>
    %c0_57 = arith.constant 0 : index
    %c0_58 = arith.constant 0 : index
    %172 = vector.load %arg11[%c0_57, %c0_58] : memref<16x128xf32, #tpu.memory_space<vmem>>, vector<16x128xf32>
    tpu.vector_store %arg11[%c0_57, %c0_58], %171 {strides = array<i32>} : memref<16x128xf32, #tpu.memory_space<vmem>>, vector<16x128xf32>,
    %c1_i32 = arith.constant 1 : i32
    %173 = arith.cmpi eq, %arg1, %c1_i32 : i32
    %174 = arith.extui %173 : i1 to i32
    %c0_i32_59 = arith.constant 0 : i32
    %175 = arith.cmpi ne, %174, %c0_i32_59 : i32
    scf.if %175 {
      %c0_60 = arith.constant 0 : index
      %c0_61 = arith.constant 0 : index
      %c0_62 = arith.constant 0 : index
      %176 = vector.load %arg10[%c0_60, %c0_61, %c0_62] : memref<1x16x128xf32, #tpu.memory_space<vmem>>, vector<1x16x128xf32>
      %177 = vector.shape_cast %176 : vector<1x16x128xf32> to vector<16x128xf32>
      %178 = vector.shape_cast %171 : vector<16x128xf32> to vector<1x16x128xf32>
      tpu.vector_store %arg10[%c0_60, %c0_61, %c0_62], %178 {strides = array<i32>} : memref<1x16x128xf32, #tpu.memory_space<vmem>>, vector<1x16x128xf32>,
    } else {
    }
    return
  }
  func.func @transform_0(%arg0: i32, %arg1: i32) -> (i32, i32, i32) {
    %c0_i32 = arith.constant 0 : i32
    %c0_i32_0 = arith.constant 0 : i32
    %c0_i32_1 = arith.constant 0 : i32
    return %arg0, %c0_i32, %c0_i32_0 : i32, i32, i32
  }
  func.func @transform_1(%arg0: i32, %arg1: i32) -> (i32, i32) {
    %c0_i32 = arith.constant 0 : i32
    %c0_i32_0 = arith.constant 0 : i32
    %c0_i32_1 = arith.constant 0 : i32
    return %c0_i32, %c0_i32_0 : i32, i32
  }
  func.func @transform_2(%arg0: i32, %arg1: i32) -> (i32, i32, i32) {
    %c0_i32 = arith.constant 0 : i32
    %c0_i32_0 = arith.constant 0 : i32
    %c0_i32_1 = arith.constant 0 : i32
    return %arg1, %c0_i32, %c0_i32_0 : i32, i32, i32
  }
  func.func @transform_3(%arg0: i32, %arg1: i32) -> (i32, i32, i32) {
    %c0_i32 = arith.constant 0 : i32
    %c0_i32_0 = arith.constant 0 : i32
    %c0_i32_1 = arith.constant 0 : i32
    return %arg1, %c0_i32, %c0_i32_0 : i32, i32, i32
  }
  func.func @transform_4(%arg0: i32, %arg1: i32) -> (i32, i32, i32) {
    %c0_i32 = arith.constant 0 : i32
    %c0_i32_0 = arith.constant 0 : i32
    %c0_i32_1 = arith.constant 0 : i32
    return %arg1, %c0_i32, %c0_i32_0 : i32, i32, i32
  }
  func.func @transform_5(%arg0: i32, %arg1: i32) -> (i32, i32, i32) {
    %c0_i32 = arith.constant 0 : i32
    %c0_i32_0 = arith.constant 0 : i32
    %c0_i32_1 = arith.constant 0 : i32
    return %arg1, %c0_i32, %c0_i32_0 : i32, i32, i32
  }
  func.func @transform_6(%arg0: i32, %arg1: i32) -> (i32, i32, i32) {
    %c0_i32 = arith.constant 0 : i32
    %c0_i32_0 = arith.constant 0 : i32
    %c0_i32_1 = arith.constant 0 : i32
    return %arg1, %c0_i32, %c0_i32_0 : i32, i32, i32
  }
  func.func @transform_7(%arg0: i32, %arg1: i32) -> (i32, i32, i32) {
    %c0_i32 = arith.constant 0 : i32
    %c0_i32_0 = arith.constant 0 : i32
    %c0_i32_1 = arith.constant 0 : i32
    return %arg1, %c0_i32, %c0_i32_0 : i32, i32, i32
  }
  func.func @transform_8(%arg0: i32, %arg1: i32) -> (i32, i32, i32) {
    %c0_i32 = arith.constant 0 : i32
    %c0_i32_0 = arith.constant 0 : i32
    %c0_i32_1 = arith.constant 0 : i32
    return %arg0, %c0_i32, %c0_i32_0 : i32, i32, i32
  }
}

</mosaic_0001>

<llo_original>
// kernel: tpu_custom_call.1
$region0: #{tpu_custom_call.1}
  #allocation0 [shape = 'u32[]', space=smem, size = 0x4, offset = 0x4, fixed_abs, tag = 'smem constant byte address 0x4 - core index']
  #allocation1 [shape = 'u32[144,128]{1,0:T(1,128)}', space=vmem, size = 0x12000, scoped, tag = 'internal scratch']
  #allocation2 [shape = 'f32[16,128]{1,0:T(8,128)}', space=vmem, size = 0x2000, scoped, tag = 'scratch operand']
  %s0 = inlined_call_operand.hbm [shape: f32[2,16,128], index: 0, kind: input, shape index: {}]
  %s1 = inlined_call_operand.hbm [shape: f32[16,16], index: 1, kind: input, shape index: {}]
  %s2 = inlined_call_operand.hbm [shape: f32[2,8,128], index: 2, kind: input, shape index: {}]
  %s3 = inlined_call_operand.vmem [shape: f32[2,1,512], index: 3, kind: input, shape index: {}]
  %s4 = inlined_call_operand.hbm [shape: bf16[2,128,384], index: 4, kind: input, shape index: {}]
  %s5 = inlined_call_operand.hbm [shape: bf16[2,128,128], index: 5, kind: input, shape index: {}]
  %s6 = inlined_call_operand.hbm [shape: bf16[2,128,512], index: 6, kind: input, shape index: {}]
  %s7 = inlined_call_operand.hbm [shape: bf16[2,512,128], index: 7, kind: input, shape index: {}]
  %s8 = inlined_call_operand.hbm [shape: f32[2,16,128], index: 8, kind: output, shape index: {}]
  %s9 = sld [smem:[#allocation0]]
  $region101: #{tpu_custom_call.1} parent=0
    _
  %s11 = ssub.s32 1, %s9
  %s12 = scalar_select 0, %s11, %s9
  $region1: #{tpu_custom_call.1} parent=0
    #allocation3 [shape = 'u8[16384]{0}', space=vmem, size = 0x4000, scoped, tag = 'input window, operand 0']
    #allocation4 [shape = 's32[2]{0}', space=sflag, size = 0x8, scoped, tag = 'scoped memory for tpu_custom_call.1']
    #allocation5 [shape = 's32[2]{0}', space=sflag, size = 0x8, scoped, tag = 'scoped memory for tpu_custom_call.1']
    #allocation6 [shape = 'u8[8192]{0}', space=vmem, size = 0x2000, scoped, tag = 'input window, operand 1, single buffered']
    #allocation7 [shape = 's32[1]{0}', space=sflag, size = 0x4, scoped, tag = 'scoped memory for tpu_custom_call.1']
    #allocation8 [shape = 'u8[8192]{0}', space=vmem, size = 0x2000, scoped, tag = 'input window, operand 2']
    #allocation9 [shape = 'u8[196608]{0}', space=vmem, size = 0x30000, scoped, tag = 'input window, operand 4']
    #allocation10 [shape = 'u8[65536]{0}', space=vmem, size = 0x10000, scoped, tag = 'input window, operand 5']
    #allocation11 [shape = 'u8[262144]{0}', space=vmem, size = 0x40000, scoped, tag = 'input window, operand 6']
    #allocation12 [shape = 'u8[262144]{0}', space=vmem, size = 0x40000, scoped, tag = 'input window, operand 7']
    #allocation13 [shape = 'u8[16384]{0}', space=vmem, size = 0x4000, scoped, tag = 'output window, operand 0']
    %13 = vsyncpa [#allocation4], 0
    %s14 = scalar_lea.sflag [#allocation4], 1
    %15 = vsyncpa %s14, 0
    %16 = vsyncpa [#allocation7], 0
    %17 = vsyncpa [#allocation5], 0
    %s18 = scalar_lea.sflag [#allocation5], 1
    %19 = vsyncpa %s18, 0
    loop: start=0, step=1, limit=6
    $region2: #{tpu_custom_call.1} parent=1 // loop_pre_header
      _
    $region3: #{tpu_custom_call.1} parent=1 // loop_header
      %s21 = sphi 0, %s25
      %p22 = scmp.ge.s32.totalorder %s21, 6
      %s28 = sphi 0, %s40
      %s29 = sphi 0, %s36
      %s30 = sphi 0, %s28
      %s31 = sphi 0, %s29
      %s32 = sphi 0, %s30
      %s33 = sphi 0, %s31
      %s43 = sphi 0, %s45
      %s46 = sphi 0, %s43
      %s47 = sphi 0, %s46
      %s63 = sphi 0, %s47
      %s67 = sphi 0, %s67
      %s69 = sphi 0, %s67
      %s70 = sphi 0, %s69
      %s84 = sphi 0, %s70
      %s90 = sphi 0, %s92
      %s93 = sphi 0, %s90
      %s94 = sphi 0, %s93
      %s110 = sphi 0, %s94
      %s116 = sphi 0, %s118
      %s119 = sphi 0, %s116
      %s120 = sphi 0, %s119
      %s136 = sphi 0, %s120
      %s142 = sphi 0, %s144
      %s145 = sphi 0, %s142
      %s146 = sphi 0, %s145
      %s162 = sphi 0, %s146
      %s168 = sphi 0, %s170
      %s171 = sphi 0, %s168
      %s172 = sphi 0, %s171
      %s188 = sphi 0, %s172
      %s194 = sphi 0, %s196
      %s197 = sphi 0, %s194
      %s198 = sphi 0, %s197
      %s214 = sphi 0, %s198
      %s220 = sphi 0, %s222
      %s223 = sphi 0, %s220
      %s224 = sphi 0, %s223
      %s240 = sphi 0, %s224
      %s246 = sphi 0, %s248
      %s249 = sphi 0, %s246
      %s250 = sphi 0, %s249
      %s266 = sphi 0, %s250
    $region4: #{tpu_custom_call.1} parent=1 // loop_header_branch
      %24 = sbr.rel (%p22) target = $region8
    $region5: #{tpu_custom_call.1} parent=1 // loop_body
      %s26 = ssub.s32 %s21, 1
      %s27 = ssub.s32 %s21, 2
      %s34 = sadd.s32 1, %s29
      %p35 = scmp.ge.s32.totalorder %s34, 2
      %s36 = scalar_select %p35, 0, %s34
      %s37 = sadd.s32 1, %s28
      %s38 = scalar_select %p35, %s37, %s28
      %p39 = scmp.ge.s32.totalorder %s38, 2
      %s40 = scalar_select %p39, 0, %s38
      %s41 = ssub.s32 %s28, %s40
      %p42 = scmp.eq.s32.totalorder %s41, 0
      %s44 = sadd.s32 %s43, 1
      %s45 = scalar_select %p42, %s43, %s44
      %p48 = pneg %p42
      %p49 = scmp.eq.s32.totalorder %s21, 3
      %p50 = por %p48, %p49
      %p51 = scmp.ne.s32.totalorder %s43, %s46
      %p52 = scmp.eq.s32.totalorder %s21, 0
      %p53 = por %p51, %p52
      %p54 = scmp.ne.s32.totalorder %s43, %s46
      %p55 = scmp.eq.s32.totalorder %s26, 3
      %p56 = por %p54, %p55
      %p57 = scmp.ne.s32.totalorder %s46, %s47
      %p58 = scmp.eq.s32.totalorder %s26, 0
      %p59 = por %p57, %p58
      %p60 = scmp.ne.s32.totalorder %s46, %s47
      %p61 = scmp.eq.s32.totalorder %s27, 3
      %p62 = por %p60, %p61
      %p64 = scmp.ne.s32.totalorder %s47, %s63
      %p65 = scmp.eq.s32.totalorder %s27, 0
      %p66 = por %p64, %p65
      %s68 = sadd.s32 %s67, 1
      %p71 = scmp.eq.s32.totalorder %s21, 3
      %p72 = scmp.ne.s32.totalorder %s67, %s69
      %p73 = scmp.eq.s32.totalorder %s21, 0
      %p74 = por %p72, %p73
      %p75 = scmp.ne.s32.totalorder %s67, %s69
      %p76 = scmp.eq.s32.totalorder %s26, 3
      %p77 = por %p75, %p76
      %p78 = scmp.ne.s32.totalorder %s69, %s70
      %p79 = scmp.eq.s32.totalorder %s26, 0
      %p80 = por %p78, %p79
      %p81 = scmp.ne.s32.totalorder %s69, %s70
      %p82 = scmp.eq.s32.totalorder %s27, 3
      %p83 = por %p81, %p82
      %p85 = scmp.ne.s32.totalorder %s70, %s84
      %p86 = scmp.eq.s32.totalorder %s27, 0
      %p87 = por %p85, %p86
      %s88 = ssub.s32 %s29, %s36
      %p89 = scmp.eq.s32.totalorder %s88, 0
      %s91 = sadd.s32 %s90, 1
      %s92 = scalar_select %p89, %s90, %s91
      %p95 = pneg %p89
      %p96 = scmp.eq.s32.totalorder %s21, 3
      %p97 = por %p95, %p96
      %p98 = scmp.ne.s32.totalorder %s90, %s93
      %p99 = scmp.eq.s32.totalorder %s21, 0
      %p100 = por %p98, %p99
      %p101 = scmp.ne.s32.totalorder %s90, %s93
      %p102 = scmp.eq.s32.totalorder %s26, 3
      %p103 = por %p101, %p102
      %p104 = scmp.ne.s32.totalorder %s93, %s94
      %p105 = scmp.eq.s32.totalorder %s26, 0
      %p106 = por %p104, %p105
      %p107 = scmp.ne.s32.totalorder %s93, %s94
      %p108 = scmp.eq.s32.totalorder %s27, 3
      %p109 = por %p107, %p108
      %p111 = scmp.ne.s32.totalorder %s94, %s110
      %p112 = scmp.eq.s32.totalorder %s27, 0
      %p113 = por %p111, %p112
      %s114 = ssub.s32 %s29, %s36
      %p115 = scmp.eq.s32.totalorder %s114, 0
      %s117 = sadd.s32 %s116, 1
      %s118 = scalar_select %p115, %s116, %s117
      %p121 = pneg %p115
      %p122 = scmp.eq.s32.totalorder %s21, 3
      %p123 = por %p121, %p122
      %p124 = scmp.ne.s32.totalorder %s116, %s119
      %p125 = scmp.eq.s32.totalorder %s21, 0
      %p126 = por %p124, %p125
      %p127 = scmp.ne.s32.totalorder %s116, %s119
      %p128 = scmp.eq.s32.totalorder %s26, 3
      %p129 = por %p127, %p128
      %p130 = scmp.ne.s32.totalorder %s119, %s120
      %p131 = scmp.eq.s32.totalorder %s26, 0
      %p132 = por %p130, %p131
      %p133 = scmp.ne.s32.totalorder %s119, %s120
      %p134 = scmp.eq.s32.totalorder %s27, 3
      %p135 = por %p133, %p134
      %p137 = scmp.ne.s32.totalorder %s120, %s136
      %p138 = scmp.eq.s32.totalorder %s27, 0
      %p139 = por %p137, %p138
      %s140 = ssub.s32 %s29, %s36
      %p141 = scmp.eq.s32.totalorder %s140, 0
      %s143 = sadd.s32 %s142, 1
      %s144 = scalar_select %p141, %s142, %s143
      %p147 = pneg %p141
      %p148 = scmp.eq.s32.totalorder %s21, 3
      %p149 = por %p147, %p148
      %p150 = scmp.ne.s32.totalorder %s142, %s145
      %p151 = scmp.eq.s32.totalorder %s21, 0
      %p152 = por %p150, %p151
      %p153 = scmp.ne.s32.totalorder %s142, %s145
      %p154 = scmp.eq.s32.totalorder %s26, 3
      %p155 = por %p153, %p154
      %p156 = scmp.ne.s32.totalorder %s145, %s146
      %p157 = scmp.eq.s32.totalorder %s26, 0
      %p158 = por %p156, %p157
      %p159 = scmp.ne.s32.totalorder %s145, %s146
      %p160 = scmp.eq.s32.totalorder %s27, 3
      %p161 = por %p159, %p160
      %p163 = scmp.ne.s32.totalorder %s146, %s162
      %p164 = scmp.eq.s32.totalorder %s27, 0
      %p165 = por %p163, %p164
      %s166 = ssub.s32 %s29, %s36
      %p167 = scmp.eq.s32.totalorder %s166, 0
      %s169 = sadd.s32 %s168, 1
      %s170 = scalar_select %p167, %s168, %s169
      %p173 = pneg %p167
      %p174 = scmp.eq.s32.totalorder %s21, 3
      %p175 = por %p173, %p174
      %p176 = scmp.ne.s32.totalorder %s168, %s171
      %p177 = scmp.eq.s32.totalorder %s21, 0
      %p178 = por %p176, %p177
      %p179 = scmp.ne.s32.totalorder %s168, %s171
      %p180 = scmp.eq.s32.totalorder %s26, 3
      %p181 = por %p179, %p180
      %p182 = scmp.ne.s32.totalorder %s171, %s172
      %p183 = scmp.eq.s32.totalorder %s26, 0
      %p184 = por %p182, %p183
      %p185 = scmp.ne.s32.totalorder %s171, %s172
      %p186 = scmp.eq.s32.totalorder %s27, 3
      %p187 = por %p185, %p186
      %p189 = scmp.ne.s32.totalorder %s172, %s188
      %p190 = scmp.eq.s32.totalorder %s27, 0
      %p191 = por %p189, %p190
      %s192 = ssub.s32 %s29, %s36
      %p193 = scmp.eq.s32.totalorder %s192, 0
      %s195 = sadd.s32 %s194, 1
      %s196 = scalar_select %p193, %s194, %s195
      %p199 = pneg %p193
      %p200 = scmp.eq.s32.totalorder %s21, 3
      %p201 = por %p199, %p200
      %p202 = scmp.ne.s32.totalorder %s194, %s197
      %p203 = scmp.eq.s32.totalorder %s21, 0
      %p204 = por %p202, %p203
      %p205 = scmp.ne.s32.totalorder %s194, %s197
      %p206 = scmp.eq.s32.totalorder %s26, 3
      %p207 = por %p205, %p206
      %p208 = scmp.ne.s32.totalorder %s197, %s198
      %p209 = scmp.eq.s32.totalorder %s26, 0
      %p210 = por %p208, %p209
      %p211 = scmp.ne.s32.totalorder %s197, %s198
      %p212 = scmp.eq.s32.totalorder %s27, 3
      %p213 = por %p211, %p212
      %p215 = scmp.ne.s32.totalorder %s198, %s214
      %p216 = scmp.eq.s32.totalorder %s27, 0
      %p217 = por %p215, %p216
      %s218 = ssub.s32 %s29, %s36
      %p219 = scmp.eq.s32.totalorder %s218, 0
      %s221 = sadd.s32 %s220, 1
      %s222 = scalar_select %p219, %s220, %s221
      %p225 = pneg %p219
      %p226 = scmp.eq.s32.totalorder %s21, 3
      %p227 = por %p225, %p226
      %p228 = scmp.ne.s32.totalorder %s220, %s223
      %p229 = scmp.eq.s32.totalorder %s21, 0
      %p230 = por %p228, %p229
      %p231 = scmp.ne.s32.totalorder %s220, %s223
      %p232 = scmp.eq.s32.totalorder %s26, 3
      %p233 = por %p231, %p232
      %p234 = scmp.ne.s32.totalorder %s223, %s224
      %p235 = scmp.eq.s32.totalorder %s26, 0
      %p236 = por %p234, %p235
      %p237 = scmp.ne.s32.totalorder %s223, %s224
      %p238 = scmp.eq.s32.totalorder %s27, 3
      %p239 = por %p237, %p238
      %p241 = scmp.ne.s32.totalorder %s224, %s240
      %p242 = scmp.eq.s32.totalorder %s27, 0
      %p243 = por %p241, %p242
      %s244 = ssub.s32 %s28, %s40
      %p245 = scmp.eq.s32.totalorder %s244, 0
      %s247 = sadd.s32 %s246, 1
      %s248 = scalar_select %p245, %s246, %s247
      %p251 = pneg %p245
      %p252 = scmp.eq.s32.totalorder %s21, 3
      %p253 = por %p251, %p252
      %p254 = scmp.ne.s32.totalorder %s246, %s249
      %p255 = scmp.eq.s32.totalorder %s21, 0
      %p256 = por %p254, %p255
      %p257 = scmp.ne.s32.totalorder %s246, %s249
      %p258 = scmp.eq.s32.totalorder %s26, 3
      %p259 = por %p257, %p258
      %p260 = scmp.ne.s32.totalorder %s249, %s250
      %p261 = scmp.eq.s32.totalorder %s26, 0
      %p262 = por %p260, %p261
      %p263 = scmp.ne.s32.totalorder %s249, %s250
      %p264 = scmp.eq.s32.totalorder %s27, 3
      %p265 = por %p263, %p264
      %p267 = scmp.ne.s32.totalorder %s250, %s266
      %p268 = scmp.eq.s32.totalorder %s27, 0
      %p269 = por %p267, %p268
      %p270 = scmp.le.s32.totalorder 1, %s21
      %p271 = scmp.lt.s32.totalorder %s21, 5
      %p272 = pnand %p270, %p271
      %p273 = pneg %p272
      // Predicated region
      $region9: #{tpu_custom_call.1} parent=5 // pred_check
        _
      $region10: #{tpu_custom_call.1} parent=5 // pred_check_branch
        %275 = sbr.rel (%p272) target = $region12
      $region11: #{tpu_custom_call.1} parent=5 // pred_region
        %s276 = ssub.s32 %s21, 1
        // Predicated region
        $region13: #{tpu_custom_call.1} parent=11 // pred_check
          %p277 = pneg %p80
        $region14: #{tpu_custom_call.1} parent=11 // pred_check_branch
          %279 = sbr.rel (%p277) target = $region16
        $region15: #{tpu_custom_call.1} parent=11 // pred_region
          %s281 = ssub.s32 256, 256
          %282 = vsyncadd [#allocation7], %s281
          %s283 = sshll.u32 [#allocation6], 4
          %s284 = int_to_ptr.vmem [resolvable:$true] %s283
          %289 = dma.hbm_to_vmem [thread:$0]  %s1, 256, %s284, [#allocation7], 128, 128, 8
        $region16: #{tpu_custom_call.1} parent=11 // pred_fallthru
          _
      $region12: #{tpu_custom_call.1} parent=5 // pred_fallthru
        _
      %p290 = scmp.lt.s32.totalorder %s21, 4
      // Predicated region
      $region17: #{tpu_custom_call.1} parent=5 // pred_check
        %p291 = pneg %p290
      $region18: #{tpu_custom_call.1} parent=5 // pred_check_branch
        %293 = sbr.rel (%p291) target = $region20
      $region19: #{tpu_custom_call.1} parent=5 // pred_region
        // Predicated region
        $region21: #{tpu_custom_call.1} parent=19 // pred_check
          %p294 = pneg %p53
        $region22: #{tpu_custom_call.1} parent=19 // pred_check_branch
          %296 = sbr.rel (%p294) target = $region24
        $region23: #{tpu_custom_call.1} parent=19 // pred_region
          %s297 = sand.u32 %s21, 1
          %s298 = scalar_lea.sflag [#allocation4], %s297
          %s299 = sand.u32 %s43, 1
          %s300 = smul.addr %s299, 16
          %s301 = scalar_lea.vmem [#allocation3], %s300
          %s303 = ssub.s32 256, 256
          %304 = vsyncadd %s298, %s303
          %s305 = smul.addr %s28, 2
          %s306 = smul.addr %s305, 128
          %s307 = scalar_lea.hbm %s0, %s306
          %s308 = sshll.u32 %s301, 4
          %s309 = int_to_ptr.vmem [resolvable:$true] %s308
          %314 = dma.hbm_to_vmem [thread:$0]  %s307, 256, %s309, %s298, 128, 128, 8
        $region24: #{tpu_custom_call.1} parent=19 // pred_fallthru
          _
        // Predicated region
        $region25: #{tpu_custom_call.1} parent=19 // pred_check
          %p315 = pneg %p100
        $region26: #{tpu_custom_call.1} parent=19 // pred_check_branch
          %317 = sbr.rel (%p315) target = $region28
        $region27: #{tpu_custom_call.1} parent=19 // pred_region
          %s318 = sand.u32 %s21, 1
          %s319 = scalar_lea.sflag [#allocation4], %s318
          %s320 = sand.u32 %s90, 1
          %s321 = smul.addr %s320, 8
          %s322 = scalar_lea.vmem [#allocation8], %s321
          %s324 = ssub.s32 128, 128
          %325 = vsyncadd %s319, %s324
          %s326 = smul.addr %s29, 128
          %s327 = scalar_lea.hbm %s2, %s326
          %s329 = sshll.u32 %s322, 4
          %s330 = int_to_ptr.vmem [resolvable:$true] %s329
          %332 = dma.hbm_to_vmem [thread:$0]  %s327, 128, %s330, %s319
        $region28: #{tpu_custom_call.1} parent=19 // pred_fallthru
          _
        // Predicated region
        $region29: #{tpu_custom_call.1} parent=19 // pred_check
          %p333 = pneg %p126
        $region30: #{tpu_custom_call.1} parent=19 // pred_check_branch
          %335 = sbr.rel (%p333) target = $region32
        $region31: #{tpu_custom_call.1} parent=19 // pred_region
          %p336 = scmp.lt.s32.totalorder %s29, 1
          %s337 = scalar_select %p336, %s29, 1
          %s338 = smul.addr %s337, 4
          %s339 = scalar_lea.vmem %s3, %s338
        $region32: #{tpu_custom_call.1} parent=19 // pred_fallthru
          _
        // Predicated region
        $region33: #{tpu_custom_call.1} parent=19 // pred_check
          %p340 = pneg %p152
        $region34: #{tpu_custom_call.1} parent=19 // pred_check_branch
          %342 = sbr.rel (%p340) target = $region36
        $region35: #{tpu_custom_call.1} parent=19 // pred_region
          %s343 = sand.u32 %s21, 1
          %s344 = scalar_lea.sflag [#allocation4], %s343
          %s345 = sand.u32 %s142, 1
          %s346 = smul.addr %s345, 192
          %s347 = scalar_lea.vmem [#allocation9], %s346
          %s349 = ssub.s32 3072, 3072
          %350 = vsyncadd %s344, %s349
          %s351 = smul.addr %s29, 48
          %s352 = smul.addr %s351, 64
          %s353 = scalar_lea.hbm %s4, %s352
          %s354 = sshll.u32 %s347, 4
          %s355 = int_to_ptr.vmem [resolvable:$true] %s354
          %360 = dma.hbm_to_vmem [thread:$0]  %s353, 3072, %s355, %s344, 192, 192, 12
        $region36: #{tpu_custom_call.1} parent=19 // pred_fallthru
          _
        // Predicated region
        $region37: #{tpu_custom_call.1} parent=19 // pred_check
          %p361 = pneg %p178
        $region38: #{tpu_custom_call.1} parent=19 // pred_check_branch
          %363 = sbr.rel (%p361) target = $region40
        $region39: #{tpu_custom_call.1} parent=19 // pred_region
          %s364 = sand.u32 %s21, 1
          %s365 = scalar_lea.sflag [#allocation4], %s364
          %s366 = sand.u32 %s168, 1
          %s367 = smul.addr %s366, 64
          %s368 = scalar_lea.vmem [#allocation10], %s367
          %s370 = ssub.s32 1024, 1024
          %371 = vsyncadd %s365, %s370
          %s372 = smul.addr %s29, 16
          %s373 = smul.addr %s372, 64
          %s374 = scalar_lea.hbm %s5, %s373
          %s375 = sshll.u32 %s368, 4
          %s376 = int_to_ptr.vmem [resolvable:$true] %s375
          %381 = dma.hbm_to_vmem [thread:$0]  %s374, 1024, %s376, %s365, 64, 64, 4
        $region40: #{tpu_custom_call.1} parent=19 // pred_fallthru
          _
        // Predicated region
        $region41: #{tpu_custom_call.1} parent=19 // pred_check
          %p382 = pneg %p204
        $region42: #{tpu_custom_call.1} parent=19 // pred_check_branch
          %384 = sbr.rel (%p382) target = $region44
        $region43: #{tpu_custom_call.1} parent=19 // pred_region
          %s385 = sand.u32 %s21, 1
          %s386 = scalar_lea.sflag [#allocation4], %s385
          %s387 = sand.u32 %s194, 1
          %s388 = smul.addr %s387, 256
          %s389 = scalar_lea.vmem [#allocation11], %s388
          %s391 = ssub.s32 4096, 4096
          %392 = vsyncadd %s386, %s391
          %s393 = smul.addr %s29, 64
          %s394 = smul.addr %s393, 64
          %s395 = scalar_lea.hbm %s6, %s394
          %s396 = sshll.u32 %s389, 4
          %s397 = int_to_ptr.vmem [resolvable:$true] %s396
          %402 = dma.hbm_to_vmem [thread:$0]  %s395, 4096, %s397, %s386, 256, 256, 16
        $region44: #{tpu_custom_call.1} parent=19 // pred_fallthru
          _
        // Predicated region
        $region45: #{tpu_custom_call.1} parent=19 // pred_check
          %p403 = pneg %p230
        $region46: #{tpu_custom_call.1} parent=19 // pred_check_branch
          %405 = sbr.rel (%p403) target = $region48
        $region47: #{tpu_custom_call.1} parent=19 // pred_region
          %s406 = sand.u32 %s21, 1
          %s407 = scalar_lea.sflag [#allocation4], %s406
          %s408 = sand.u32 %s220, 1
          %s409 = smul.addr %s408, 256
          %s410 = scalar_lea.vmem [#allocation12], %s409
          %s412 = ssub.s32 4096, 4096
          %413 = vsyncadd %s407, %s412
          %s414 = smul.addr %s29, 64
          %s415 = smul.addr %s414, 64
          %s416 = scalar_lea.hbm %s7, %s415
          %s417 = sshll.u32 %s410, 4
          %s418 = int_to_ptr.vmem [resolvable:$true] %s417
          %423 = dma.hbm_to_vmem [thread:$0]  %s416, 4096, %s418, %s407, 64, 64, 4
        $region48: #{tpu_custom_call.1} parent=19 // pred_fallthru
          _
      $region20: #{tpu_custom_call.1} parent=5 // pred_fallthru
        _
      %p424 = scmp.le.s32.totalorder 1, %s21
      %p425 = scmp.lt.s32.totalorder %s21, 5
      %p426 = pnand %p424, %p425
      %p427 = pneg %p426
      // Predicated region
      $region49: #{tpu_custom_call.1} parent=5 // pred_check
        _
      $region50: #{tpu_custom_call.1} parent=5 // pred_check_branch
        %429 = sbr.rel (%p426) target = $region52
      $region51: #{tpu_custom_call.1} parent=5 // pred_region
        %s430 = ssub.s32 %s21, 1
        %s431 = sand.u32 %s26, 1
        %s432 = scalar_lea.sflag [#allocation4], %s431
        %s433 = sand.u32 %s46, 1
        %s434 = smul.addr %s433, 16
        %s435 = scalar_lea.vmem [#allocation3], %s434
        // Predicated region
        $region53: #{tpu_custom_call.1} parent=51 // pred_check
          %p436 = pneg %p59
        $region54: #{tpu_custom_call.1} parent=51 // pred_check_branch
          %438 = sbr.rel (%p436) target = $region56
        $region55: #{tpu_custom_call.1} parent=51 // pred_region
          %439 = dma.done %s432, 256
        $region56: #{tpu_custom_call.1} parent=51 // pred_fallthru
          _
        // Predicated region
        $region57: #{tpu_custom_call.1} parent=51 // pred_check
          %p440 = pneg %p80
        $region58: #{tpu_custom_call.1} parent=51 // pred_check_branch
          %442 = sbr.rel (%p440) target = $region60
        $region59: #{tpu_custom_call.1} parent=51 // pred_region
          %443 = dma.done [#allocation7], 256
        $region60: #{tpu_custom_call.1} parent=51 // pred_fallthru
          _
        %s444 = sand.u32 %s26, 1
        %s445 = scalar_lea.sflag [#allocation4], %s444
        %s446 = sand.u32 %s93, 1
        %s447 = smul.addr %s446, 8
        %s448 = scalar_lea.vmem [#allocation8], %s447
        // Predicated region
        $region61: #{tpu_custom_call.1} parent=51 // pred_check
          %p449 = pneg %p106
        $region62: #{tpu_custom_call.1} parent=51 // pred_check_branch
          %451 = sbr.rel (%p449) target = $region64
        $region63: #{tpu_custom_call.1} parent=51 // pred_region
          %452 = dma.done %s445, 128
        $region64: #{tpu_custom_call.1} parent=51 // pred_fallthru
          _
        %s453 = sand.u32 %s26, 1
        %s454 = scalar_lea.sflag [#allocation4], %s453
        %s455 = sand.u32 %s145, 1
        %s456 = smul.addr %s455, 192
        %s457 = scalar_lea.vmem [#allocation9], %s456
        // Predicated region
        $region65: #{tpu_custom_call.1} parent=51 // pred_check
          %p458 = pneg %p158
        $region66: #{tpu_custom_call.1} parent=51 // pred_check_branch
          %460 = sbr.rel (%p458) target = $region68
        $region67: #{tpu_custom_call.1} parent=51 // pred_region
          %461 = dma.done %s454, 3072
        $region68: #{tpu_custom_call.1} parent=51 // pred_fallthru
          _
        %s462 = sand.u32 %s26, 1
        %s463 = scalar_lea.sflag [#allocation4], %s462
        %s464 = sand.u32 %s171, 1
        %s465 = smul.addr %s464, 64
        %s466 = scalar_lea.vmem [#allocation10], %s465
        // Predicated region
        $region69: #{tpu_custom_call.1} parent=51 // pred_check
          %p467 = pneg %p184
        $region70: #{tpu_custom_call.1} parent=51 // pred_check_branch
          %469 = sbr.rel (%p467) target = $region72
        $region71: #{tpu_custom_call.1} parent=51 // pred_region
          %470 = dma.done %s463, 1024
        $region72: #{tpu_custom_call.1} parent=51 // pred_fallthru
          _
        %s471 = sand.u32 %s26, 1
        %s472 = scalar_lea.sflag [#allocation4], %s471
        %s473 = sand.u32 %s197, 1
        %s474 = smul.addr %s473, 256
        %s475 = scalar_lea.vmem [#allocation11], %s474
        // Predicated region
        $region73: #{tpu_custom_call.1} parent=51 // pred_check
          %p476 = pneg %p210
        $region74: #{tpu_custom_call.1} parent=51 // pred_check_branch
          %478 = sbr.rel (%p476) target = $region76
        $region75: #{tpu_custom_call.1} parent=51 // pred_region
          %479 = dma.done %s472, 4096
        $region76: #{tpu_custom_call.1} parent=51 // pred_fallthru
          _
        %s480 = sand.u32 %s26, 1
        %s481 = scalar_lea.sflag [#allocation4], %s480
        %s482 = sand.u32 %s223, 1
        %s483 = smul.addr %s482, 256
        %s484 = scalar_lea.vmem [#allocation12], %s483
        // Predicated region
        $region77: #{tpu_custom_call.1} parent=51 // pred_check
          %p485 = pneg %p236
        $region78: #{tpu_custom_call.1} parent=51 // pred_check_branch
          %487 = sbr.rel (%p485) target = $region80
        $region79: #{tpu_custom_call.1} parent=51 // pred_region
          %488 = dma.done %s481, 4096
        $region80: #{tpu_custom_call.1} parent=51 // pred_fallthru
          _
        %s489 = sand.u32 %s26, 1
        %s490 = scalar_lea.sflag [#allocation4], %s489
        %s491 = sand.u32 %s46, 1
        %s492 = smul.addr %s491, 16
        %s493 = scalar_lea.vmem [#allocation3], %s492
        %p494 = pneg %p59
        %p495 = pneg %p56
        %p496 = pneg %p80
        %p497 = pneg %p77
        %s498 = sand.u32 %s26, 1
        %s499 = scalar_lea.sflag [#allocation4], %s498
        %s500 = sand.u32 %s93, 1
        %s501 = smul.addr %s500, 8
        %s502 = scalar_lea.vmem [#allocation8], %s501
        %p503 = pneg %p106
        %p504 = pneg %p103
        %p505 = scmp.lt.s32.totalorder %s31, 1
        %s506 = scalar_select %p505, %s31, 1
        %s507 = smul.addr %s506, 4
        %s508 = scalar_lea.vmem %s3, %s507
        %p509 = pneg %p132
        %p510 = pneg %p129
        %s511 = sand.u32 %s26, 1
        %s512 = scalar_lea.sflag [#allocation4], %s511
        %s513 = sand.u32 %s145, 1
        %s514 = smul.addr %s513, 192
        %s515 = scalar_lea.vmem [#allocation9], %s514
        %p516 = pneg %p158
        %p517 = pneg %p155
        %s518 = sand.u32 %s26, 1
        %s519 = scalar_lea.sflag [#allocation4], %s518
        %s520 = sand.u32 %s171, 1
        %s521 = smul.addr %s520, 64
        %s522 = scalar_lea.vmem [#allocation10], %s521
        %p523 = pneg %p184
        %p524 = pneg %p181
        %s525 = sand.u32 %s26, 1
        %s526 = scalar_lea.sflag [#allocation4], %s525
        %s527 = sand.u32 %s197, 1
        %s528 = smul.addr %s527, 256
        %s529 = scalar_lea.vmem [#allocation11], %s528
        %p530 = pneg %p210
        %p531 = pneg %p207
        %s532 = sand.u32 %s26, 1
        %s533 = scalar_lea.sflag [#allocation4], %s532
        %s534 = sand.u32 %s223, 1
        %s535 = smul.addr %s534, 256
        %s536 = scalar_lea.vmem [#allocation12], %s535
        %p537 = pneg %p236
        %p538 = pneg %p233
        %p539 = pneg %p262
        %p540 = pneg %p259
        %s541 = sand.u32 %s249, 1
        %s542 = scalar_lea.sflag [#allocation5], %s541
        %s543 = sand.u32 %s249, 1
        %s544 = smul.addr %s543, 16
        %s545 = scalar_lea.vmem [#allocation13], %s544
        %p546 = scmp.lt.s32.totalorder %s31, 1
        %s547 = scalar_select %p546, %s31, 1
        %s548 = smul.addr %s547, 4
        %s549 = scalar_lea.vmem %s3, %s548
        %p551 = scmp.eq.s32.totalorder %s31, 0
        // Predicated region
        $region81: #{tpu_custom_call.1} parent=51 // pred_check
          %p552 = pneg %p551
        $region82: #{tpu_custom_call.1} parent=51 // pred_check_branch
          %554 = sbr.rel (%p552) target = $region84
        $region83: #{tpu_custom_call.1} parent=51 // pred_region
          %v555 = vld [vmem:[%s435] sm:$0xff]
          %v556 = vld [vmem:[%s435 + $0x8] sm:$0xff]
          %557 = vst [vmem:[#allocation2] sm:$0xff] %v555
          %558 = vst [vmem:[#allocation2 + $0x8] sm:$0xff] %v556
        $region84: #{tpu_custom_call.1} parent=51 // pred_fallthru
          _
        %v559 = vld [vmem:[#allocation2] sm:$0xff]
        %v560 = vld [vmem:[#allocation2 + $0x8] sm:$0xff]
        %v561 = vld [vmem:[%s448] sm:$0xff]
        %v562 = vld [vmem:[%s549] sm:$0xf]
        %563 = vadd.xlane.f32.xlu0 %v559
        %v564 = vpop.xlane.xlu0 %563
        %565 = vadd.xlane.f32.xlu0 %v560
        %v566 = vpop.xlane.xlu0 %565
        %v567 = vrcp.pop 128.0
        %v568 = vmul.f32 %v564, %v567
        %v569 = vmul.f32 %v566, %v567
        %v570 = vsub.f32 %v559, %v568
        %v571 = vsub.f32 %v560, %v569
        %v572 = vmul.f32 %v570, %v570
        %v573 = vmul.f32 %v571, %v571
        %574 = vadd.xlane.f32.xlu0 %v572
        %v575 = vpop.xlane.xlu0 %574
        %576 = vadd.xlane.f32.xlu0 %v573
        %v577 = vpop.xlane.xlu0 %576
        %v578 = vmul.f32 %v575, %v567
        %v579 = vmul.f32 %v577, %v567
        %v580 = vadd.f32 %v578, 1e-05
        %v581 = vadd.f32 %v579, 1e-05
        %v582 = vrsqrt.pop %v580
        %v583 = vrsqrt.pop %v581
        %v584 = vmul.f32 %v570, %v582
        %v585 = vmul.f32 %v571, %v583
        %v586 = vlaneseq
        %v587 = vshrl.u32 %v586, 7
        %v588 = vsub.s32 0, %v587
        %v589 = vrot.slane %v561, %v588
        %v590 = vmul.f32 %v584, %v589
        %v591 = vmul.f32 %v585, %v589
        %v592 = vlaneseq
        %v593 = vshrl.u32 %v592, 7
        %v594 = vsub.s32 1, %v593
        %v595 = vrot.slane %v561, %v594
        %v596 = vadd.f32 %v590, %v595
        %v597 = vadd.f32 %v591, %v595
        %v598 = vpack.c.bf16 %v597, %v596
        %v599 = vld [vmem:[%s457] sm:$0xff]
        %v600 = vld [vmem:[%s457 + $0x8] sm:$0xf]
        %v601 = vld [vmem:[%s457 + $0xc] sm:$0xff]
        %v602 = vld [vmem:[%s457 + $0x14] sm:$0xf]
        %v603 = vld [vmem:[%s457 + $0x18] sm:$0xff]
        %v604 = vld [vmem:[%s457 + $0x20] sm:$0xf]
        %v605 = vld [vmem:[%s457 + $0x24] sm:$0xff]
        %v606 = vld [vmem:[%s457 + $0x2c] sm:$0xf]
        %v607 = vld [vmem:[%s457 + $0x30] sm:$0xff]
        %v608 = vld [vmem:[%s457 + $0x38] sm:$0xf]
        %v609 = vld [vmem:[%s457 + $0x3c] sm:$0xff]
        %v610 = vld [vmem:[%s457 + $0x44] sm:$0xf]
        %v611 = vld [vmem:[%s457 + $0x48] sm:$0xff]
        %v612 = vld [vmem:[%s457 + $0x50] sm:$0xf]
        %v613 = vld [vmem:[%s457 + $0x54] sm:$0xff]
        %v614 = vld [vmem:[%s457 + $0x5c] sm:$0xf]
        %v615 = vld [vmem:[%s457 + $0x60] sm:$0xff]
        %v616 = vld [vmem:[%s457 + $0x68] sm:$0xf]
        %v617 = vld [vmem:[%s457 + $0x6c] sm:$0xff]
        %v618 = vld [vmem:[%s457 + $0x74] sm:$0xf]
        %v619 = vld [vmem:[%s457 + $0x78] sm:$0xff]
        %v620 = vld [vmem:[%s457 + $0x80] sm:$0xf]
        %v621 = vld [vmem:[%s457 + $0x84] sm:$0xff]
        %v622 = vld [vmem:[%s457 + $0x8c] sm:$0xf]
        %v623 = vld [vmem:[%s457 + $0x90] sm:$0xff]
        %v624 = vld [vmem:[%s457 + $0x98] sm:$0xf]
        %v625 = vld [vmem:[%s457 + $0x9c] sm:$0xff]
        %v626 = vld [vmem:[%s457 + $0xa4] sm:$0xf]
        %v627 = vld [vmem:[%s457 + $0xa8] sm:$0xff]
        %v628 = vld [vmem:[%s457 + $0xb0] sm:$0xf]
        %v629 = vld [vmem:[%s457 + $0xb4] sm:$0xff]
        %v630 = vld [vmem:[%s457 + $0xbc] sm:$0xf]
        %v663 = vunpack.c.l.b16 %v599
        %v664 = vunpack.c.h.b16 %v599
        %v665 = vunpack.c.l.b16 %v600
        %v666 = vunpack.c.l.b16 %v601
        %v667 = vunpack.c.h.b16 %v601
        %v668 = vunpack.c.l.b16 %v602
        %v669 = vunpack.c.l.b16 %v603
        %v670 = vunpack.c.h.b16 %v603
        %v671 = vunpack.c.l.b16 %v604
        %v672 = vunpack.c.l.b16 %v605
        %v673 = vunpack.c.h.b16 %v605
        %v674 = vunpack.c.l.b16 %v606
        %v675 = vunpack.c.l.b16 %v607
        %v676 = vunpack.c.h.b16 %v607
        %v677 = vunpack.c.l.b16 %v608
        %v678 = vunpack.c.l.b16 %v609
        %v679 = vunpack.c.h.b16 %v609
        %v680 = vunpack.c.l.b16 %v610
        %v681 = vunpack.c.l.b16 %v611
        %v682 = vunpack.c.h.b16 %v611
        %v683 = vunpack.c.l.b16 %v612
        %v684 = vunpack.c.l.b16 %v613
        %v685 = vunpack.c.h.b16 %v613
        %v686 = vunpack.c.l.b16 %v614
        %v687 = vunpack.c.l.b16 %v615
        %v688 = vunpack.c.h.b16 %v615
        %v689 = vunpack.c.l.b16 %v616
        %v690 = vunpack.c.l.b16 %v617
        %v691 = vunpack.c.h.b16 %v617
        %v692 = vunpack.c.l.b16 %v618
        %v693 = vunpack.c.l.b16 %v619
        %v694 = vunpack.c.h.b16 %v619
        %v695 = vunpack.c.l.b16 %v620
        %v696 = vunpack.c.l.b16 %v621
        %v697 = vunpack.c.h.b16 %v621
        %v698 = vunpack.c.l.b16 %v622
        %v699 = vunpack.c.l.b16 %v623
        %v700 = vunpack.c.h.b16 %v623
        %v701 = vunpack.c.l.b16 %v624
        %v702 = vunpack.c.l.b16 %v625
        %v703 = vunpack.c.h.b16 %v625
        %v704 = vunpack.c.l.b16 %v626
        %v705 = vunpack.c.l.b16 %v627
        %v706 = vunpack.c.h.b16 %v627
        %v707 = vunpack.c.l.b16 %v628
        %v708 = vunpack.c.l.b16 %v629
        %v709 = vunpack.c.h.b16 %v629
        %v710 = vunpack.c.l.b16 %v630
        %v711 = vpack.c.b16 %v666, %v663
        %v712 = vpack.c.b16 %v667, %v664
        %v713 = vpack.c.b16 %v668, %v665
        %v714 = vpack.c.b16 %v672, %v669
        %v715 = vpack.c.b16 %v673, %v670
        %v716 = vpack.c.b16 %v674, %v671
        %v717 = vpack.c.b16 %v678, %v675
        %v718 = vpack.c.b16 %v679, %v676
        %v719 = vpack.c.b16 %v680, %v677
        %v720 = vpack.c.b16 %v684, %v681
        %v721 = vpack.c.b16 %v685, %v682
        %v722 = vpack.c.b16 %v686, %v683
        %v723 = vpack.c.b16 %v690, %v687
        %v724 = vpack.c.b16 %v691, %v688
        %v725 = vpack.c.b16 %v692, %v689
        %v726 = vpack.c.b16 %v696, %v693
        %v727 = vpack.c.b16 %v697, %v694
        %v728 = vpack.c.b16 %v698, %v695
        %v729 = vpack.c.b16 %v702, %v699
        %v730 = vpack.c.b16 %v703, %v700
        %v731 = vpack.c.b16 %v704, %v701
        %v732 = vpack.c.b16 %v708, %v705
        %v733 = vpack.c.b16 %v709, %v706
        %v734 = vpack.c.b16 %v710, %v707
        %759 = vmatprep.subr.bf16.mxu0 %v712
        %760 = vmatpush1.bf16.msra.mxu0 %v711
        %761 = vmatprep.subr.bf16.mxu0 %v715
        %762 = vmatpush1.bf16.msra.mxu0 %v714
        %763 = vmatprep.subr.bf16.mxu0 %v718
        %764 = vmatpush1.bf16.msra.mxu0 %v717
        %765 = vmatprep.subr.bf16.mxu0 %v721
        %766 = vmatpush1.bf16.msra.mxu0 %v720
        %767 = vmatprep.subr.bf16.mxu0 %v724
        %768 = vmatpush1.bf16.msra.mxu0 %v723
        %769 = vmatprep.subr.bf16.mxu0 %v727
        %770 = vmatpush1.bf16.msra.mxu0 %v726
        %771 = vmatprep.subr.bf16.mxu0 %v730
        %772 = vmatpush1.bf16.msra.mxu0 %v729
        %773 = vmatprep.subr.bf16.mxu0 %v733
        %774 = vmatpush1.bf16.msra.mxu0 %v732
        %775 = vmatprep.subr.bf16.mxu0 0
        %776 = vmatpush1.bf16.msra.mxu0 0
        %777 = vmatprep.subr.bf16.mxu0 0
        %778 = vmatpush1.bf16.msra.mxu0 0
        %779 = vmatprep.subr.bf16.mxu0 0
        %780 = vmatpush1.bf16.msra.mxu0 0
        %781 = vmatprep.subr.bf16.mxu0 0
        %782 = vmatpush1.bf16.msra.mxu0 0
        %783 = vmatprep.subr.bf16.mxu0 0
        %784 = vmatpush1.bf16.msra.mxu0 0
        %785 = vmatprep.subr.bf16.mxu0 0
        %786 = vmatpush1.bf16.msra.mxu0 0
        %787 = vmatprep.subr.bf16.mxu0 0
        %788 = vmatpush1.bf16.msra.mxu0 0
        %789 = vmatprep.subr.bf16.mxu0 0
        %790 = vmatpush1.bf16.msra.mxu0 0
        %791 = vmatprep.mubr.bf16.mxu0 0
        %792 = vmatmul.mubr.bf16.gmra.mrb[0].mxu0 %v598
        %v793 = vpop.f32.mrb[0].mxu0
        %v794 = vadd.f32 0.0, %v793
        %v795 = vpop.f32.mrb[0].mxu0
        %v796 = vadd.f32 0.0, %v795
        %v797 = vpop.f32.mrb[0].mxu0
        %v798 = vadd.f32 0.0, %v797
        %v799 = vpop.f32.mrb[0].mxu0
        %v800 = vadd.f32 0.0, %v799
        %801 = vdwg.mxu0
        %802 = vmatprep.subr.bf16.mxu0 0
        %803 = vmatpush1.bf16.msra.mxu0 %v713
        %804 = vmatprep.subr.bf16.mxu0 0
        %805 = vmatpush1.bf16.msra.mxu0 %v716
        %806 = vmatprep.subr.bf16.mxu0 0
        %807 = vmatpush1.bf16.msra.mxu0 %v719
        %808 = vmatprep.subr.bf16.mxu0 0
        %809 = vmatpush1.bf16.msra.mxu0 %v722
        %810 = vmatprep.subr.bf16.mxu0 0
        %811 = vmatpush1.bf16.msra.mxu0 %v725
        %812 = vmatprep.subr.bf16.mxu0 0
        %813 = vmatpush1.bf16.msra.mxu0 %v728
        %814 = vmatprep.subr.bf16.mxu0 0
        %815 = vmatpush1.bf16.msra.mxu0 %v731
        %816 = vmatprep.subr.bf16.mxu0 0
        %817 = vmatpush1.bf16.msra.mxu0 %v734
        %818 = vmatprep.subr.bf16.mxu0 0
        %819 = vmatpush1.bf16.msra.mxu0 0
        %820 = vmatprep.subr.bf16.mxu0 0
        %821 = vmatpush1.bf16.msra.mxu0 0
        %822 = vmatprep.subr.bf16.mxu0 0
        %823 = vmatpush1.bf16.msra.mxu0 0
        %824 = vmatprep.subr.bf16.mxu0 0
        %825 = vmatpush1.bf16.msra.mxu0 0
        %826 = vmatprep.subr.bf16.mxu0 0
        %827 = vmatpush1.bf16.msra.mxu0 0
        %828 = vmatprep.subr.bf16.mxu0 0
        %829 = vmatpush1.bf16.msra.mxu0 0
        %830 = vmatprep.subr.bf16.mxu0 0
        %831 = vmatpush1.bf16.msra.mxu0 0
        %832 = vmatprep.subr.bf16.mxu0 0
        %833 = vmatpush1.bf16.msra.mxu0 0
        %834 = vmatprep.mubr.bf16.mxu0 0
        %835 = vmatmul.mubr.bf16.gmra.mrb[0].mxu0 %v598
        %v836 = vpop.f32.mrb[0].mxu0
        %v837 = vadd.f32 0.0, %v836
        %v838 = vpop.f32.mrb[0].mxu0
        %v839 = vpop.f32.mrb[0].mxu0
        %v840 = vadd.f32 0.0, %v839
        %v841 = vpop.f32.mrb[0].mxu0
        %842 = vdwg.mxu0
        %v843 = vmul.f32 %v794, 0.17677669
        %v844 = vmul.f32 %v798, 0.17677669
        %v845 = vpack.c.bf16 %v844, %v843
        %v846 = vpack.c.bf16 %v800, %v796
        %v847 = vpack.c.bf16 %v840, %v837
        %v848 = vld [vmem:[#allocation6] sm:$0xff]
        %v849 = vld [vmem:[#allocation6 + $0x8] sm:$0xff]
        %v850 = vld [vmem:[%s466] sm:$0xf]
        %v851 = vld [vmem:[%s466 + $0x4] sm:$0xf]
        %v852 = vld [vmem:[%s466 + $0x8] sm:$0xf]
        %v853 = vld [vmem:[%s466 + $0xc] sm:$0xf]
        %v854 = vld [vmem:[%s466 + $0x10] sm:$0xf]
        %v855 = vld [vmem:[%s466 + $0x14] sm:$0xf]
        %v856 = vld [vmem:[%s466 + $0x18] sm:$0xf]
        %v857 = vld [vmem:[%s466 + $0x1c] sm:$0xf]
        %v858 = vld [vmem:[%s466 + $0x20] sm:$0xf]
        %v859 = vld [vmem:[%s466 + $0x24] sm:$0xf]
        %v860 = vld [vmem:[%s466 + $0x28] sm:$0xf]
        %v861 = vld [vmem:[%s466 + $0x2c] sm:$0xf]
        %v862 = vld [vmem:[%s466 + $0x30] sm:$0xf]
        %v863 = vld [vmem:[%s466 + $0x34] sm:$0xf]
        %v864 = vld [vmem:[%s466 + $0x38] sm:$0xf]
        %v865 = vld [vmem:[%s466 + $0x3c] sm:$0xf]
        %v866 = vlaneseq
        %v867 = vshrl.u32 %v866, 7
        %v868 = vsub.s32 4, %v867
        %v869 = vrot.slane %v561, %v868
        %v870 = vadd.f32 %v869, 0.0
        %vm871 = vcmask 261120
        %v873 = vsel %vm871, %v845, 0
        %v876 = vsel %vm871, %v846, 0
        %878 = vmatprep.subr.bf16.mxu0 0
        %879 = vmatpush1.bf16.xpose.msra.mxu0 %v876
        %880 = vmatprep.subr.bf16.mxu0 0
        %881 = vmatpush1.bf16.xpose.msra.mxu0 0
        %882 = vmatprep.subr.bf16.mxu0 0
        %883 = vmatpush1.bf16.xpose.msra.mxu0 0
        %884 = vmatprep.subr.bf16.mxu0 0
        %885 = vmatpush1.bf16.xpose.msra.mxu0 0
        %886 = vmatprep.subr.bf16.mxu0 0
        %887 = vmatpush1.bf16.xpose.msra.mxu0 0
        %888 = vmatprep.subr.bf16.mxu0 0
        %889 = vmatpush1.bf16.xpose.msra.mxu0 0
        %890 = vmatprep.subr.bf16.mxu0 0
        %891 = vmatpush1.bf16.xpose.msra.mxu0 0
        %892 = vmatprep.subr.bf16.mxu0 0
        %893 = vmatpush1.bf16.xpose.msra.mxu0 0
        %894 = vmatprep.subr.bf16.mxu0 0
        %895 = vmatpush1.bf16.xpose.msra.mxu0 0
        %896 = vmatprep.subr.bf16.mxu0 0
        %897 = vmatpush1.bf16.xpose.msra.mxu0 0
        %898 = vmatprep.subr.bf16.mxu0 0
        %899 = vmatpush1.bf16.xpose.msra.mxu0 0
        %900 = vmatprep.subr.bf16.mxu0 0
        %901 = vmatpush1.bf16.xpose.msra.mxu0 0
        %902 = vmatprep.subr.bf16.mxu0 0
        %903 = vmatpush1.bf16.xpose.msra.mxu0 0
        %904 = vmatprep.subr.bf16.mxu0 0
        %905 = vmatpush1.bf16.xpose.msra.mxu0 0
        %906 = vmatprep.subr.bf16.mxu0 0
        %907 = vmatpush1.bf16.xpose.msra.mxu0 0
        %908 = vmatprep.subr.bf16.mxu0 0
        %909 = vmatpush1.bf16.xpose.msra.mxu0 0
        %910 = vmatprep.mubr.bf16.mxu0 0
        %911 = vmatmul.mubr.bf16.gmra.mrb[0].mxu0 %v873
        %v912 = vpop.f32.mrb[0].mxu0
        %v913 = vadd.f32 %v848, %v912
        %v914 = vpop.f32.mrb[0].mxu0
        %v915 = vpop.f32.mrb[0].mxu0
        %v916 = vadd.f32 %v849, %v915
        %v917 = vpop.f32.mrb[0].mxu0
        %918 = vdwg.mxu0
        %vm919 = vcmask 130048
        %v920 = vsel %vm919, %v913, -inf
        %921 = vmax.xlane.f32.xlu0 %v920
        %v922 = vpop.xlane.xlu0 %921
        %v923 = vsel %vm919, %v916, -inf
        %924 = vmax.xlane.f32.xlu0 %v923
        %v925 = vpop.xlane.xlu0 %924
        %v926 = vsub.f32 %v913, %v922
        %v927 = vsub.f32 %v916, %v925
        %v928 = vmul.f32 %v926, 1.442695
        %v929 = vpow.pop %v928
        %v930 = vmul.f32 %v927, 1.442695
        %v931 = vpow.pop %v930
        %v932 = vsel %vm919, %v929, 0.0
        %933 = vadd.xlane.f32.xlu0 %v932
        %v934 = vpop.xlane.xlu0 %933
        %v935 = vsel %vm919, %v931, 0.0
        %936 = vadd.xlane.f32.xlu0 %v935
        %v937 = vpop.xlane.xlu0 %936
        %v938 = vrcp.pop %v934
        %v939 = vrcp.pop %v937
        %v940 = vmul.f32 %v929, %v938
        %v941 = vmul.f32 %v931, %v939
        %v942 = vpack.c.bf16 %v941, %v940
        %v944 = vsel %vm919, %v942, 0
        %946 = vmatprep.subr.bf16.mxu0 0
        %947 = vmatpush1.bf16.msra.mxu0 %v847
        %948 = vmatprep.subr.bf16.mxu0 0
        %949 = vmatpush1.bf16.msra.mxu0 0
        %950 = vmatprep.subr.bf16.mxu0 0
        %951 = vmatpush1.bf16.msra.mxu0 0
        %952 = vmatprep.subr.bf16.mxu0 0
        %953 = vmatpush1.bf16.msra.mxu0 0
        %954 = vmatprep.subr.bf16.mxu0 0
        %955 = vmatpush1.bf16.msra.mxu0 0
        %956 = vmatprep.subr.bf16.mxu0 0
        %957 = vmatpush1.bf16.msra.mxu0 0
        %958 = vmatprep.subr.bf16.mxu0 0
        %959 = vmatpush1.bf16.msra.mxu0 0
        %960 = vmatprep.subr.bf16.mxu0 0
        %961 = vmatpush1.bf16.msra.mxu0 0
        %962 = vmatprep.subr.bf16.mxu0 0
        %963 = vmatpush1.bf16.msra.mxu0 0
        %964 = vmatprep.subr.bf16.mxu0 0
        %965 = vmatpush1.bf16.msra.mxu0 0
        %966 = vmatprep.subr.bf16.mxu0 0
        %967 = vmatpush1.bf16.msra.mxu0 0
        %968 = vmatprep.subr.bf16.mxu0 0
        %969 = vmatpush1.bf16.msra.mxu0 0
        %970 = vmatprep.subr.bf16.mxu0 0
        %971 = vmatpush1.bf16.msra.mxu0 0
        %972 = vmatprep.subr.bf16.mxu0 0
        %973 = vmatpush1.bf16.msra.mxu0 0
        %974 = vmatprep.subr.bf16.mxu0 0
        %975 = vmatpush1.bf16.msra.mxu0 0
        %976 = vmatprep.subr.bf16.mxu0 0
        %977 = vmatpush1.bf16.msra.mxu0 0
        %978 = vmatprep.mubr.bf16.mxu0 0
        %979 = vmatmul.mubr.bf16.gmra.mrb[0].mxu0 %v944
        %v980 = vpop.f32.mrb[0].mxu0
        %v981 = vadd.f32 0.0, %v980
        %v982 = vpop.f32.mrb[0].mxu0
        %v983 = vpop.f32.mrb[0].mxu0
        %v984 = vadd.f32 0.0, %v983
        %v985 = vpop.f32.mrb[0].mxu0
        %986 = vdwg.mxu0
        %v987 = vpack.c.bf16 %v984, %v981
        %v992 = vunpack.c.l.b16 %v850
        %v993 = vunpack.c.l.b16 %v851
        %v994 = vunpack.c.l.b16 %v852
        %v995 = vunpack.c.l.b16 %v853
        %v996 = vpack.c.b16 %v993, %v992
        %v997 = vpack.c.b16 %v995, %v994
        %v1001 = vsel %vm871, %v987, 0
        %1003 = vmatprep.subr.bf16.mxu0 0
        %1004 = vmatpush1.bf16.msra.mxu0 %v996
        %1005 = vmatprep.subr.bf16.mxu0 0
        %1006 = vmatpush1.bf16.msra.mxu0 %v997
        %1007 = vmatprep.subr.bf16.mxu0 0
        %1008 = vmatpush1.bf16.msra.mxu0 0
        %1009 = vmatprep.subr.bf16.mxu0 0
        %1010 = vmatpush1.bf16.msra.mxu0 0
        %1011 = vmatprep.subr.bf16.mxu0 0
        %1012 = vmatpush1.bf16.msra.mxu0 0
        %1013 = vmatprep.subr.bf16.mxu0 0
        %1014 = vmatpush1.bf16.msra.mxu0 0
        %1015 = vmatprep.subr.bf16.mxu0 0
        %1016 = vmatpush1.bf16.msra.mxu0 0
        %1017 = vmatprep.subr.bf16.mxu0 0
        %1018 = vmatpush1.bf16.msra.mxu0 0
        %1019 = vmatprep.subr.bf16.mxu0 0
        %1020 = vmatpush1.bf16.msra.mxu0 0
        %1021 = vmatprep.subr.bf16.mxu0 0
        %1022 = vmatpush1.bf16.msra.mxu0 0
        %1023 = vmatprep.subr.bf16.mxu0 0
        %1024 = vmatpush1.bf16.msra.mxu0 0
        %1025 = vmatprep.subr.bf16.mxu0 0
        %1026 = vmatpush1.bf16.msra.mxu0 0
        %1027 = vmatprep.subr.bf16.mxu0 0
        %1028 = vmatpush1.bf16.msra.mxu0 0
        %1029 = vmatprep.subr.bf16.mxu0 0
        %1030 = vmatpush1.bf16.msra.mxu0 0
        %1031 = vmatprep.subr.bf16.mxu0 0
        %1032 = vmatpush1.bf16.msra.mxu0 0
        %1033 = vmatprep.subr.bf16.mxu0 0
        %1034 = vmatpush1.bf16.msra.mxu0 0
        %1035 = vmatprep.mubr.bf16.mxu0 0
        %1036 = vmatmul.mubr.bf16.gmra.mrb[0].mxu0 %v1001
        %v1037 = vpop.f32.mrb[0].mxu0
        %v1038 = vadd.f32 0.0, %v1037
        %v1039 = vpop.f32.mrb[0].mxu0
        %v1040 = vpop.f32.mrb[0].mxu0
        %v1041 = vadd.f32 0.0, %v1040
        %v1042 = vpop.f32.mrb[0].mxu0
        %1043 = vdwg.mxu0
        %v1044 = vadd.f32 %v870, %v1038
        %v1045 = vadd.f32 %v870, %v1041
        %1047 = vrot.lane.b32.xlu0 %v845, 96
        %v1048 = vpop.permute.xlu0 %1047
        %1050 = vrot.lane.b32.xlu0 %v846, 96
        %v1051 = vpop.permute.xlu0 %1050
        %v1053 = vsel %vm871, %v1048, 0
        %v1056 = vsel %vm871, %v1051, 0
        %1058 = vmatprep.subr.bf16.mxu0 0
        %1059 = vmatpush1.bf16.xpose.msra.mxu0 %v1056
        %1060 = vmatprep.subr.bf16.mxu0 0
        %1061 = vmatpush1.bf16.xpose.msra.mxu0 0
        %1062 = vmatprep.subr.bf16.mxu0 0
        %1063 = vmatpush1.bf16.xpose.msra.mxu0 0
        %1064 = vmatprep.subr.bf16.mxu0 0
        %1065 = vmatpush1.bf16.xpose.msra.mxu0 0
        %1066 = vmatprep.subr.bf16.mxu0 0
        %1067 = vmatpush1.bf16.xpose.msra.mxu0 0
        %1068 = vmatprep.subr.bf16.mxu0 0
        %1069 = vmatpush1.bf16.xpose.msra.mxu0 0
        %1070 = vmatprep.subr.bf16.mxu0 0
        %1071 = vmatpush1.bf16.xpose.msra.mxu0 0
        %1072 = vmatprep.subr.bf16.mxu0 0
        %1073 = vmatpush1.bf16.xpose.msra.mxu0 0
        %1074 = vmatprep.subr.bf16.mxu0 0
        %1075 = vmatpush1.bf16.xpose.msra.mxu0 0
        %1076 = vmatprep.subr.bf16.mxu0 0
        %1077 = vmatpush1.bf16.xpose.msra.mxu0 0
        %1078 = vmatprep.subr.bf16.mxu0 0
        %1079 = vmatpush1.bf16.xpose.msra.mxu0 0
        %1080 = vmatprep.subr.bf16.mxu0 0
        %1081 = vmatpush1.bf16.xpose.msra.mxu0 0
        %1082 = vmatprep.subr.bf16.mxu0 0
        %1083 = vmatpush1.bf16.xpose.msra.mxu0 0
        %1084 = vmatprep.subr.bf16.mxu0 0
        %1085 = vmatpush1.bf16.xpose.msra.mxu0 0
        %1086 = vmatprep.subr.bf16.mxu0 0
        %1087 = vmatpush1.bf16.xpose.msra.mxu0 0
        %1088 = vmatprep.subr.bf16.mxu0 0
        %1089 = vmatpush1.bf16.xpose.msra.mxu0 0
        %1090 = vmatprep.mubr.bf16.mxu0 0
        %1091 = vmatmul.mubr.bf16.gmra.mrb[0].mxu0 %v1053
        %v1092 = vpop.f32.mrb[0].mxu0
        %v1093 = vadd.f32 %v848, %v1092
        %v1094 = vpop.f32.mrb[0].mxu0
        %v1095 = vpop.f32.mrb[0].mxu0
        %v1096 = vadd.f32 %v849, %v1095
        %v1097 = vpop.f32.mrb[0].mxu0
        %1098 = vdwg.mxu0
        %v1099 = vsel %vm919, %v1093, -inf
        %1100 = vmax.xlane.f32.xlu0 %v1099
        %v1101 = vpop.xlane.xlu0 %1100
        %v1102 = vsel %vm919, %v1096, -inf
        %1103 = vmax.xlane.f32.xlu0 %v1102
        %v1104 = vpop.xlane.xlu0 %1103
        %v1105 = vsub.f32 %v1093, %v1101
        %v1106 = vsub.f32 %v1096, %v1104
        %v1107 = vmul.f32 %v1105, 1.442695
        %v1108 = vpow.pop %v1107
        %v1109 = vmul.f32 %v1106, 1.442695
        %v1110 = vpow.pop %v1109
        %v1111 = vsel %vm919, %v1108, 0.0
        %1112 = vadd.xlane.f32.xlu0 %v1111
        %v1113 = vpop.xlane.xlu0 %1112
        %v1114 = vsel %vm919, %v1110, 0.0
        %1115 = vadd.xlane.f32.xlu0 %v1114
        %v1116 = vpop.xlane.xlu0 %1115
        %v1117 = vrcp.pop %v1113
        %v1118 = vrcp.pop %v1116
        %v1119 = vmul.f32 %v1108, %v1117
        %v1120 = vmul.f32 %v1110, %v1118
        %v1121 = vpack.c.bf16 %v1120, %v1119
        %1123 = vrot.lane.b32.xlu0 %v847, 96
        %v1124 = vpop.permute.xlu0 %1123
        %v1127 = vsel %vm919, %v1121, 0
        %1129 = vmatprep.subr.bf16.mxu0 0
        %1130 = vmatpush1.bf16.msra.mxu0 %v1124
        %1131 = vmatprep.subr.bf16.mxu0 0
        %1132 = vmatpush1.bf16.msra.mxu0 0
        %1133 = vmatprep.subr.bf16.mxu0 0
        %1134 = vmatpush1.bf16.msra.mxu0 0
        %1135 = vmatprep.subr.bf16.mxu0 0
        %1136 = vmatpush1.bf16.msra.mxu0 0
        %1137 = vmatprep.subr.bf16.mxu0 0
        %1138 = vmatpush1.bf16.msra.mxu0 0
        %1139 = vmatprep.subr.bf16.mxu0 0
        %1140 = vmatpush1.bf16.msra.mxu0 0
        %1141 = vmatprep.subr.bf16.mxu0 0
        %1142 = vmatpush1.bf16.msra.mxu0 0
        %1143 = vmatprep.subr.bf16.mxu0 0
        %1144 = vmatpush1.bf16.msra.mxu0 0
        %1145 = vmatprep.subr.bf16.mxu0 0
        %1146 = vmatpush1.bf16.msra.mxu0 0
        %1147 = vmatprep.subr.bf16.mxu0 0
        %1148 = vmatpush1.bf16.msra.mxu0 0
        %1149 = vmatprep.subr.bf16.mxu0 0
        %1150 = vmatpush1.bf16.msra.mxu0 0
        %1151 = vmatprep.subr.bf16.mxu0 0
        %1152 = vmatpush1.bf16.msra.mxu0 0
        %1153 = vmatprep.subr.bf16.mxu0 0
        %1154 = vmatpush1.bf16.msra.mxu0 0
        %1155 = vmatprep.subr.bf16.mxu0 0
        %1156 = vmatpush1.bf16.msra.mxu0 0
        %1157 = vmatprep.subr.bf16.mxu0 0
        %1158 = vmatpush1.bf16.msra.mxu0 0
        %1159 = vmatprep.subr.bf16.mxu0 0
        %1160 = vmatpush1.bf16.msra.mxu0 0
        %1161 = vmatprep.mubr.bf16.mxu0 0
        %1162 = vmatmul.mubr.bf16.gmra.mrb[0].mxu0 %v1127
        %v1163 = vpop.f32.mrb[0].mxu0
        %v1164 = vadd.f32 0.0, %v1163
        %v1165 = vpop.f32.mrb[0].mxu0
        %v1166 = vpop.f32.mrb[0].mxu0
        %v1167 = vadd.f32 0.0, %v1166
        %v1168 = vpop.f32.mrb[0].mxu0
        %1169 = vdwg.mxu0
        %v1170 = vpack.c.bf16 %v1167, %v1164
        %v1175 = vunpack.c.l.b16 %v854
        %v1176 = vunpack.c.l.b16 %v855
        %v1177 = vunpack.c.l.b16 %v856
        %v1178 = vunpack.c.l.b16 %v857
        %v1179 = vpack.c.b16 %v1176, %v1175
        %v1180 = vpack.c.b16 %v1178, %v1177
        %v1184 = vsel %vm871, %v1170, 0
        %1186 = vmatprep.subr.bf16.mxu0 0
        %1187 = vmatpush1.bf16.msra.mxu0 %v1179
        %1188 = vmatprep.subr.bf16.mxu0 0
        %1189 = vmatpush1.bf16.msra.mxu0 %v1180
        %1190 = vmatprep.subr.bf16.mxu0 0
        %1191 = vmatpush1.bf16.msra.mxu0 0
        %1192 = vmatprep.subr.bf16.mxu0 0
        %1193 = vmatpush1.bf16.msra.mxu0 0
        %1194 = vmatprep.subr.bf16.mxu0 0
        %1195 = vmatpush1.bf16.msra.mxu0 0
        %1196 = vmatprep.subr.bf16.mxu0 0
        %1197 = vmatpush1.bf16.msra.mxu0 0
        %1198 = vmatprep.subr.bf16.mxu0 0
        %1199 = vmatpush1.bf16.msra.mxu0 0
        %1200 = vmatprep.subr.bf16.mxu0 0
        %1201 = vmatpush1.bf16.msra.mxu0 0
        %1202 = vmatprep.subr.bf16.mxu0 0
        %1203 = vmatpush1.bf16.msra.mxu0 0
        %1204 = vmatprep.subr.bf16.mxu0 0
        %1205 = vmatpush1.bf16.msra.mxu0 0
        %1206 = vmatprep.subr.bf16.mxu0 0
        %1207 = vmatpush1.bf16.msra.mxu0 0
        %1208 = vmatprep.subr.bf16.mxu0 0
        %1209 = vmatpush1.bf16.msra.mxu0 0
        %1210 = vmatprep.subr.bf16.mxu0 0
        %1211 = vmatpush1.bf16.msra.mxu0 0
        %1212 = vmatprep.subr.bf16.mxu0 0
        %1213 = vmatpush1.bf16.msra.mxu0 0
        %1214 = vmatprep.subr.bf16.mxu0 0
        %1215 = vmatpush1.bf16.msra.mxu0 0
        %1216 = vmatprep.subr.bf16.mxu0 0
        %1217 = vmatpush1.bf16.msra.mxu0 0
        %1218 = vmatprep.mubr.bf16.mxu0 0
        %1219 = vmatmul.mubr.bf16.gmra.mrb[0].mxu0 %v1184
        %v1220 = vpop.f32.mrb[0].mxu0
        %v1221 = vadd.f32 0.0, %v1220
        %v1222 = vpop.f32.mrb[0].mxu0
        %v1223 = vpop.f32.mrb[0].mxu0
        %v1224 = vadd.f32 0.0, %v1223
        %v1225 = vpop.f32.mrb[0].mxu0
        %1226 = vdwg.mxu0
        %v1227 = vadd.f32 %v1044, %v1221
        %v1228 = vadd.f32 %v1045, %v1224
        %1229 = vrot.lane.b32.xlu0 %v845, 64
        %v1230 = vpop.permute.xlu0 %1229
        %1231 = vrot.lane.b32.xlu0 %v846, 64
        %v1232 = vpop.permute.xlu0 %1231
        %v1234 = vsel %vm871, %v1230, 0
        %v1237 = vsel %vm871, %v1232, 0
        %1239 = vmatprep.subr.bf16.mxu0 0
        %1240 = vmatpush1.bf16.xpose.msra.mxu0 %v1237
        %1241 = vmatprep.subr.bf16.mxu0 0
        %1242 = vmatpush1.bf16.xpose.msra.mxu0 0
        %1243 = vmatprep.subr.bf16.mxu0 0
        %1244 = vmatpush1.bf16.xpose.msra.mxu0 0
        %1245 = vmatprep.subr.bf16.mxu0 0
        %1246 = vmatpush1.bf16.xpose.msra.mxu0 0
        %1247 = vmatprep.subr.bf16.mxu0 0
        %1248 = vmatpush1.bf16.xpose.msra.mxu0 0
        %1249 = vmatprep.subr.bf16.mxu0 0
        %1250 = vmatpush1.bf16.xpose.msra.mxu0 0
        %1251 = vmatprep.subr.bf16.mxu0 0
        %1252 = vmatpush1.bf16.xpose.msra.mxu0 0
        %1253 = vmatprep.subr.bf16.mxu0 0
        %1254 = vmatpush1.bf16.xpose.msra.mxu0 0
        %1255 = vmatprep.subr.bf16.mxu0 0
        %1256 = vmatpush1.bf16.xpose.msra.mxu0 0
        %1257 = vmatprep.subr.bf16.mxu0 0
        %1258 = vmatpush1.bf16.xpose.msra.mxu0 0
        %1259 = vmatprep.subr.bf16.mxu0 0
        %1260 = vmatpush1.bf16.xpose.msra.mxu0 0
        %1261 = vmatprep.subr.bf16.mxu0 0
        %1262 = vmatpush1.bf16.xpose.msra.mxu0 0
        %1263 = vmatprep.subr.bf16.mxu0 0
        %1264 = vmatpush1.bf16.xpose.msra.mxu0 0
        %1265 = vmatprep.subr.bf16.mxu0 0
        %1266 = vmatpush1.bf16.xpose.msra.mxu0 0
        %1267 = vmatprep.subr.bf16.mxu0 0
        %1268 = vmatpush1.bf16.xpose.msra.mxu0 0
        %1269 = vmatprep.subr.bf16.mxu0 0
        %1270 = vmatpush1.bf16.xpose.msra.mxu0 0
        %1271 = vmatprep.mubr.bf16.mxu0 0
        %1272 = vmatmul.mubr.bf16.gmra.mrb[0].mxu0 %v1234
        %v1273 = vpop.f32.mrb[0].mxu0
        %v1274 = vadd.f32 %v848, %v1273
        %v1275 = vpop.f32.mrb[0].mxu0
        %v1276 = vpop.f32.mrb[0].mxu0
        %v1277 = vadd.f32 %v849, %v1276
        %v1278 = vpop.f32.mrb[0].mxu0
        %1279 = vdwg.mxu0
        %v1280 = vsel %vm919, %v1274, -inf
        %1281 = vmax.xlane.f32.xlu0 %v1280
        %v1282 = vpop.xlane.xlu0 %1281
        %v1283 = vsel %vm919, %v1277, -inf
        %1284 = vmax.xlane.f32.xlu0 %v1283
        %v1285 = vpop.xlane.xlu0 %1284
        %v1286 = vsub.f32 %v1274, %v1282
        %v1287 = vsub.f32 %v1277, %v1285
        %v1288 = vmul.f32 %v1286, 1.442695
        %v1289 = vpow.pop %v1288
        %v1290 = vmul.f32 %v1287, 1.442695
        %v1291 = vpow.pop %v1290
        %v1292 = vsel %vm919, %v1289, 0.0
        %1293 = vadd.xlane.f32.xlu0 %v1292
        %v1294 = vpop.xlane.xlu0 %1293
        %v1295 = vsel %vm919, %v1291, 0.0
        %1296 = vadd.xlane.f32.xlu0 %v1295
        %v1297 = vpop.xlane.xlu0 %1296
        %v1298 = vrcp.pop %v1294
        %v1299 = vrcp.pop %v1297
        %v1300 = vmul.f32 %v1289, %v1298
        %v1301 = vmul.f32 %v1291, %v1299
        %v1302 = vpack.c.bf16 %v1301, %v1300
        %1303 = vrot.lane.b32.xlu0 %v847, 64
        %v1304 = vpop.permute.xlu0 %1303
        %v1307 = vsel %vm919, %v1302, 0
        %1309 = vmatprep.subr.bf16.mxu0 0
        %1310 = vmatpush1.bf16.msra.mxu0 %v1304
        %1311 = vmatprep.subr.bf16.mxu0 0
        %1312 = vmatpush1.bf16.msra.mxu0 0
        %1313 = vmatprep.subr.bf16.mxu0 0
        %1314 = vmatpush1.bf16.msra.mxu0 0
        %1315 = vmatprep.subr.bf16.mxu0 0
        %1316 = vmatpush1.bf16.msra.mxu0 0
        %1317 = vmatprep.subr.bf16.mxu0 0
        %1318 = vmatpush1.bf16.msra.mxu0 0
        %1319 = vmatprep.subr.bf16.mxu0 0
        %1320 = vmatpush1.bf16.msra.mxu0 0
        %1321 = vmatprep.subr.bf16.mxu0 0
        %1322 = vmatpush1.bf16.msra.mxu0 0
        %1323 = vmatprep.subr.bf16.mxu0 0
        %1324 = vmatpush1.bf16.msra.mxu0 0
        %1325 = vmatprep.subr.bf16.mxu0 0
        %1326 = vmatpush1.bf16.msra.mxu0 0
        %1327 = vmatprep.subr.bf16.mxu0 0
        %1328 = vmatpush1.bf16.msra.mxu0 0
        %1329 = vmatprep.subr.bf16.mxu0 0
        %1330 = vmatpush1.bf16.msra.mxu0 0
        %1331 = vmatprep.subr.bf16.mxu0 0
        %1332 = vmatpush1.bf16.msra.mxu0 0
        %1333 = vmatprep.subr.bf16.mxu0 0
        %1334 = vmatpush1.bf16.msra.mxu0 0
        %1335 = vmatprep.subr.bf16.mxu0 0
        %1336 = vmatpush1.bf16.msra.mxu0 0
        %1337 = vmatprep.subr.bf16.mxu0 0
        %1338 = vmatpush1.bf16.msra.mxu0 0
        %1339 = vmatprep.subr.bf16.mxu0 0
        %1340 = vmatpush1.bf16.msra.mxu0 0
        %1341 = vmatprep.mubr.bf16.mxu0 0
        %1342 = vmatmul.mubr.bf16.gmra.mrb[0].mxu0 %v1307
        %v1343 = vpop.f32.mrb[0].mxu0
        %v1344 = vadd.f32 0.0, %v1343
        %v1345 = vpop.f32.mrb[0].mxu0
        %v1346 = vpop.f32.mrb[0].mxu0
        %v1347 = vadd.f32 0.0, %v1346
        %v1348 = vpop.f32.mrb[0].mxu0
        %1349 = vdwg.mxu0
        %v1350 = vpack.c.bf16 %v1347, %v1344
        %v1355 = vunpack.c.l.b16 %v858
        %v1356 = vunpack.c.l.b16 %v859
        %v1357 = vunpack.c.l.b16 %v860
        %v1358 = vunpack.c.l.b16 %v861
        %v1359 = vpack.c.b16 %v1356, %v1355
        %v1360 = vpack.c.b16 %v1358, %v1357
        %v1364 = vsel %vm871, %v1350, 0
        %1366 = vmatprep.subr.bf16.mxu0 0
        %1367 = vmatpush1.bf16.msra.mxu0 %v1359
        %1368 = vmatprep.subr.bf16.mxu0 0
        %1369 = vmatpush1.bf16.msra.mxu0 %v1360
        %1370 = vmatprep.subr.bf16.mxu0 0
        %1371 = vmatpush1.bf16.msra.mxu0 0
        %1372 = vmatprep.subr.bf16.mxu0 0
        %1373 = vmatpush1.bf16.msra.mxu0 0
        %1374 = vmatprep.subr.bf16.mxu0 0
        %1375 = vmatpush1.bf16.msra.mxu0 0
        %1376 = vmatprep.subr.bf16.mxu0 0
        %1377 = vmatpush1.bf16.msra.mxu0 0
        %1378 = vmatprep.subr.bf16.mxu0 0
        %1379 = vmatpush1.bf16.msra.mxu0 0
        %1380 = vmatprep.subr.bf16.mxu0 0
        %1381 = vmatpush1.bf16.msra.mxu0 0
        %1382 = vmatprep.subr.bf16.mxu0 0
        %1383 = vmatpush1.bf16.msra.mxu0 0
        %1384 = vmatprep.subr.bf16.mxu0 0
        %1385 = vmatpush1.bf16.msra.mxu0 0
        %1386 = vmatprep.subr.bf16.mxu0 0
        %1387 = vmatpush1.bf16.msra.mxu0 0
        %1388 = vmatprep.subr.bf16.mxu0 0
        %1389 = vmatpush1.bf16.msra.mxu0 0
        %1390 = vmatprep.subr.bf16.mxu0 0
        %1391 = vmatpush1.bf16.msra.mxu0 0
        %1392 = vmatprep.subr.bf16.mxu0 0
        %1393 = vmatpush1.bf16.msra.mxu0 0
        %1394 = vmatprep.subr.bf16.mxu0 0
        %1395 = vmatpush1.bf16.msra.mxu0 0
        %1396 = vmatprep.subr.bf16.mxu0 0
        %1397 = vmatpush1.bf16.msra.mxu0 0
        %1398 = vmatprep.mubr.bf16.mxu0 0
        %1399 = vmatmul.mubr.bf16.gmra.mrb[0].mxu0 %v1364
        %v1400 = vpop.f32.mrb[0].mxu0
        %v1401 = vadd.f32 0.0, %v1400
        %v1402 = vpop.f32.mrb[0].mxu0
        %v1403 = vpop.f32.mrb[0].mxu0
        %v1404 = vadd.f32 0.0, %v1403
        %v1405 = vpop.f32.mrb[0].mxu0
        %1406 = vdwg.mxu0
        %v1407 = vadd.f32 %v1227, %v1401
        %v1408 = vadd.f32 %v1228, %v1404
        %1409 = vrot.lane.b32.xlu0 %v845, 32
        %v1410 = vpop.permute.xlu0 %1409
        %1411 = vrot.lane.b32.xlu0 %v846, 32
        %v1412 = vpop.permute.xlu0 %1411
        %v1414 = vsel %vm871, %v1410, 0
        %v1417 = vsel %vm871, %v1412, 0
        %1419 = vmatprep.subr.bf16.mxu0 0
        %1420 = vmatpush1.bf16.xpose.msra.mxu0 %v1417
        %1421 = vmatprep.subr.bf16.mxu0 0
        %1422 = vmatpush1.bf16.xpose.msra.mxu0 0
        %1423 = vmatprep.subr.bf16.mxu0 0
        %1424 = vmatpush1.bf16.xpose.msra.mxu0 0
        %1425 = vmatprep.subr.bf16.mxu0 0
        %1426 = vmatpush1.bf16.xpose.msra.mxu0 0
        %1427 = vmatprep.subr.bf16.mxu0 0
        %1428 = vmatpush1.bf16.xpose.msra.mxu0 0
        %1429 = vmatprep.subr.bf16.mxu0 0
        %1430 = vmatpush1.bf16.xpose.msra.mxu0 0
        %1431 = vmatprep.subr.bf16.mxu0 0
        %1432 = vmatpush1.bf16.xpose.msra.mxu0 0
        %1433 = vmatprep.subr.bf16.mxu0 0
        %1434 = vmatpush1.bf16.xpose.msra.mxu0 0
        %1435 = vmatprep.subr.bf16.mxu0 0
        %1436 = vmatpush1.bf16.xpose.msra.mxu0 0
        %1437 = vmatprep.subr.bf16.mxu0 0
        %1438 = vmatpush1.bf16.xpose.msra.mxu0 0
        %1439 = vmatprep.subr.bf16.mxu0 0
        %1440 = vmatpush1.bf16.xpose.msra.mxu0 0
        %1441 = vmatprep.subr.bf16.mxu0 0
        %1442 = vmatpush1.bf16.xpose.msra.mxu0 0
        %1443 = vmatprep.subr.bf16.mxu0 0
        %1444 = vmatpush1.bf16.xpose.msra.mxu0 0
        %1445 = vmatprep.subr.bf16.mxu0 0
        %1446 = vmatpush1.bf16.xpose.msra.mxu0 0
        %1447 = vmatprep.subr.bf16.mxu0 0
        %1448 = vmatpush1.bf16.xpose.msra.mxu0 0
        %1449 = vmatprep.subr.bf16.mxu0 0
        %1450 = vmatpush1.bf16.xpose.msra.mxu0 0
        %1451 = vmatprep.mubr.bf16.mxu0 0
        %1452 = vmatmul.mubr.bf16.gmra.mrb[0].mxu0 %v1414
        %v1453 = vpop.f32.mrb[0].mxu0
        %v1454 = vadd.f32 %v848, %v1453
        %v1455 = vpop.f32.mrb[0].mxu0
        %v1456 = vpop.f32.mrb[0].mxu0
        %v1457 = vadd.f32 %v849, %v1456
        %v1458 = vpop.f32.mrb[0].mxu0
        %1459 = vdwg.mxu0
        %v1460 = vsel %vm919, %v1454, -inf
        %1461 = vmax.xlane.f32.xlu0 %v1460
        %v1462 = vpop.xlane.xlu0 %1461
        %v1463 = vsel %vm919, %v1457, -inf
        %1464 = vmax.xlane.f32.xlu0 %v1463
        %v1465 = vpop.xlane.xlu0 %1464
        %v1466 = vsub.f32 %v1454, %v1462
        %v1467 = vsub.f32 %v1457, %v1465
        %v1468 = vmul.f32 %v1466, 1.442695
        %v1469 = vpow.pop %v1468
        %v1470 = vmul.f32 %v1467, 1.442695
        %v1471 = vpow.pop %v1470
        %v1472 = vsel %vm919, %v1469, 0.0
        %1473 = vadd.xlane.f32.xlu0 %v1472
        %v1474 = vpop.xlane.xlu0 %1473
        %v1475 = vsel %vm919, %v1471, 0.0
        %1476 = vadd.xlane.f32.xlu0 %v1475
        %v1477 = vpop.xlane.xlu0 %1476
        %v1478 = vrcp.pop %v1474
        %v1479 = vrcp.pop %v1477
        %v1480 = vmul.f32 %v1469, %v1478
        %v1481 = vmul.f32 %v1471, %v1479
        %v1482 = vpack.c.bf16 %v1481, %v1480
        %1483 = vrot.lane.b32.xlu0 %v847, 32
        %v1484 = vpop.permute.xlu0 %1483
        %v1487 = vsel %vm919, %v1482, 0
        %1489 = vmatprep.subr.bf16.mxu0 0
        %1490 = vmatpush1.bf16.msra.mxu0 %v1484
        %1491 = vmatprep.subr.bf16.mxu0 0
        %1492 = vmatpush1.bf16.msra.mxu0 0
        %1493 = vmatprep.subr.bf16.mxu0 0
        %1494 = vmatpush1.bf16.msra.mxu0 0
        %1495 = vmatprep.subr.bf16.mxu0 0
        %1496 = vmatpush1.bf16.msra.mxu0 0
        %1497 = vmatprep.subr.bf16.mxu0 0
        %1498 = vmatpush1.bf16.msra.mxu0 0
        %1499 = vmatprep.subr.bf16.mxu0 0
        %1500 = vmatpush1.bf16.msra.mxu0 0
        %1501 = vmatprep.subr.bf16.mxu0 0
        %1502 = vmatpush1.bf16.msra.mxu0 0
        %1503 = vmatprep.subr.bf16.mxu0 0
        %1504 = vmatpush1.bf16.msra.mxu0 0
        %1505 = vmatprep.subr.bf16.mxu0 0
        %1506 = vmatpush1.bf16.msra.mxu0 0
        %1507 = vmatprep.subr.bf16.mxu0 0
        %1508 = vmatpush1.bf16.msra.mxu0 0
        %1509 = vmatprep.subr.bf16.mxu0 0
        %1510 = vmatpush1.bf16.msra.mxu0 0
        %1511 = vmatprep.subr.bf16.mxu0 0
        %1512 = vmatpush1.bf16.msra.mxu0 0
        %1513 = vmatprep.subr.bf16.mxu0 0
        %1514 = vmatpush1.bf16.msra.mxu0 0
        %1515 = vmatprep.subr.bf16.mxu0 0
        %1516 = vmatpush1.bf16.msra.mxu0 0
        %1517 = vmatprep.subr.bf16.mxu0 0
        %1518 = vmatpush1.bf16.msra.mxu0 0
        %1519 = vmatprep.subr.bf16.mxu0 0
        %1520 = vmatpush1.bf16.msra.mxu0 0
        %1521 = vmatprep.mubr.bf16.mxu0 0
        %1522 = vmatmul.mubr.bf16.gmra.mrb[0].mxu0 %v1487
        %v1523 = vpop.f32.mrb[0].mxu0
        %v1524 = vadd.f32 0.0, %v1523
        %v1525 = vpop.f32.mrb[0].mxu0
        %v1526 = vpop.f32.mrb[0].mxu0
        %v1527 = vadd.f32 0.0, %v1526
        %v1528 = vpop.f32.mrb[0].mxu0
        %1529 = vdwg.mxu0
        %v1530 = vpack.c.bf16 %v1527, %v1524
        %v1535 = vunpack.c.l.b16 %v862
        %v1536 = vunpack.c.l.b16 %v863
        %v1537 = vunpack.c.l.b16 %v864
        %v1538 = vunpack.c.l.b16 %v865
        %v1539 = vpack.c.b16 %v1536, %v1535
        %v1540 = vpack.c.b16 %v1538, %v1537
        %v1544 = vsel %vm871, %v1530, 0
        %1546 = vmatprep.subr.bf16.mxu0 0
        %1547 = vmatpush1.bf16.msra.mxu0 %v1539
        %1548 = vmatprep.subr.bf16.mxu0 0
        %1549 = vmatpush1.bf16.msra.mxu0 %v1540
        %1550 = vmatprep.subr.bf16.mxu0 0
        %1551 = vmatpush1.bf16.msra.mxu0 0
        %1552 = vmatprep.subr.bf16.mxu0 0
        %1553 = vmatpush1.bf16.msra.mxu0 0
        %1554 = vmatprep.subr.bf16.mxu0 0
        %1555 = vmatpush1.bf16.msra.mxu0 0
        %1556 = vmatprep.subr.bf16.mxu0 0
        %1557 = vmatpush1.bf16.msra.mxu0 0
        %1558 = vmatprep.subr.bf16.mxu0 0
        %1559 = vmatpush1.bf16.msra.mxu0 0
        %1560 = vmatprep.subr.bf16.mxu0 0
        %1561 = vmatpush1.bf16.msra.mxu0 0
        %1562 = vmatprep.subr.bf16.mxu0 0
        %1563 = vmatpush1.bf16.msra.mxu0 0
        %1564 = vmatprep.subr.bf16.mxu0 0
        %1565 = vmatpush1.bf16.msra.mxu0 0
        %1566 = vmatprep.subr.bf16.mxu0 0
        %1567 = vmatpush1.bf16.msra.mxu0 0
        %1568 = vmatprep.subr.bf16.mxu0 0
        %1569 = vmatpush1.bf16.msra.mxu0 0
        %1570 = vmatprep.subr.bf16.mxu0 0
        %1571 = vmatpush1.bf16.msra.mxu0 0
        %1572 = vmatprep.subr.bf16.mxu0 0
        %1573 = vmatpush1.bf16.msra.mxu0 0
        %1574 = vmatprep.subr.bf16.mxu0 0
        %1575 = vmatpush1.bf16.msra.mxu0 0
        %1576 = vmatprep.subr.bf16.mxu0 0
        %1577 = vmatpush1.bf16.msra.mxu0 0
        %1578 = vmatprep.mubr.bf16.mxu0 0
        %1579 = vmatmul.mubr.bf16.gmra.mrb[0].mxu0 %v1544
        %v1580 = vpop.f32.mrb[0].mxu0
        %v1581 = vadd.f32 0.0, %v1580
        %v1582 = vpop.f32.mrb[0].mxu0
        %v1583 = vpop.f32.mrb[0].mxu0
        %v1584 = vadd.f32 0.0, %v1583
        %v1585 = vpop.f32.mrb[0].mxu0
        %1586 = vdwg.mxu0
        %v1587 = vadd.f32 %v1407, %v1581
        %v1588 = vadd.f32 %v1408, %v1584
        %v1589 = vadd.f32 %v559, %v1587
        %v1590 = vadd.f32 %v560, %v1588
        %1591 = vadd.xlane.f32.xlu0 %v1589
        %v1592 = vpop.xlane.xlu0 %1591
        %1593 = vadd.xlane.f32.xlu0 %v1590
        %v1594 = vpop.xlane.xlu0 %1593
        %v1595 = vmul.f32 %v1592, %v567
        %v1596 = vmul.f32 %v1594, %v567
        %v1597 = vsub.f32 %v1589, %v1595
        %v1598 = vsub.f32 %v1590, %v1596
        %v1599 = vmul.f32 %v1597, %v1597
        %v1600 = vmul.f32 %v1598, %v1598
        %1601 = vadd.xlane.f32.xlu0 %v1599
        %v1602 = vpop.xlane.xlu0 %1601
        %1603 = vadd.xlane.f32.xlu0 %v1600
        %v1604 = vpop.xlane.xlu0 %1603
        %v1605 = vmul.f32 %v1602, %v567
        %v1606 = vmul.f32 %v1604, %v567
        %v1607 = vadd.f32 %v1605, 1e-05
        %v1608 = vadd.f32 %v1606, 1e-05
        %v1609 = vrsqrt.pop %v1607
        %v1610 = vrsqrt.pop %v1608
        %v1611 = vmul.f32 %v1597, %v1609
        %v1612 = vmul.f32 %v1598, %v1610
        %v1613 = vlaneseq
        %v1614 = vshrl.u32 %v1613, 7
        %v1615 = vsub.s32 2, %v1614
        %v1616 = vrot.slane %v561, %v1615
        %v1617 = vmul.f32 %v1611, %v1616
        %v1618 = vmul.f32 %v1612, %v1616
        %v1619 = vlaneseq
        %v1620 = vshrl.u32 %v1619, 7
        %v1621 = vsub.s32 3, %v1620
        %v1622 = vrot.slane %v561, %v1621
        %v1623 = vadd.f32 %v1617, %v1622
        %v1624 = vadd.f32 %v1618, %v1622
        %v1625 = vpack.c.bf16 %v1624, %v1623
        %v1626 = vld [vmem:[%s475] sm:$0xff]
        %v1627 = vld [vmem:[%s475 + $0x8] sm:$0xff]
        %v1628 = vld [vmem:[%s475 + $0x10] sm:$0xff]
        %v1629 = vld [vmem:[%s475 + $0x18] sm:$0xff]
        %v1630 = vld [vmem:[%s475 + $0x20] sm:$0xff]
        %v1631 = vld [vmem:[%s475 + $0x28] sm:$0xff]
        %v1632 = vld [vmem:[%s475 + $0x30] sm:$0xff]
        %v1633 = vld [vmem:[%s475 + $0x38] sm:$0xff]
        %v1634 = vld [vmem:[%s475 + $0x40] sm:$0xff]
        %v1635 = vld [vmem:[%s475 + $0x48] sm:$0xff]
        %v1636 = vld [vmem:[%s475 + $0x50] sm:$0xff]
        %v1637 = vld [vmem:[%s475 + $0x58] sm:$0xff]
        %v1638 = vld [vmem:[%s475 + $0x60] sm:$0xff]
        %v1639 = vld [vmem:[%s475 + $0x68] sm:$0xff]
        %v1640 = vld [vmem:[%s475 + $0x70] sm:$0xff]
        %v1641 = vld [vmem:[%s475 + $0x78] sm:$0xff]
        %v1642 = vld [vmem:[%s475 + $0x80] sm:$0xff]
        %v1643 = vld [vmem:[%s475 + $0x88] sm:$0xff]
        %v1644 = vld [vmem:[%s475 + $0x90] sm:$0xff]
        %v1645 = vld [vmem:[%s475 + $0x98] sm:$0xff]
        %v1646 = vld [vmem:[%s475 + $0xa0] sm:$0xff]
        %v1647 = vld [vmem:[%s475 + $0xa8] sm:$0xff]
        %v1648 = vld [vmem:[%s475 + $0xb0] sm:$0xff]
        %v1649 = vld [vmem:[%s475 + $0xb8] sm:$0xff]
        %v1650 = vld [vmem:[%s475 + $0xc0] sm:$0xff]
        %v1651 = vld [vmem:[%s475 + $0xc8] sm:$0xff]
        %v1652 = vld [vmem:[%s475 + $0xd0] sm:$0xff]
        %v1653 = vld [vmem:[%s475 + $0xd8] sm:$0xff]
        %v1654 = vld [vmem:[%s475 + $0xe0] sm:$0xff]
        %v1655 = vld [vmem:[%s475 + $0xe8] sm:$0xff]
        %v1656 = vld [vmem:[%s475 + $0xf0] sm:$0xff]
        %v1657 = vld [vmem:[%s475 + $0xf8] sm:$0xff]
        %v1659 = vlaneseq
        %v1660 = vshrl.u32 %v1659, 7
        %v1661 = vsub.s32 0, %v1660
        %v1662 = vrot.slane %v562, %v1661
        %v1663 = vlaneseq
        %v1664 = vshrl.u32 %v1663, 7
        %v1665 = vsub.s32 1, %v1664
        %v1666 = vrot.slane %v562, %v1665
        %v1667 = vlaneseq
        %v1668 = vshrl.u32 %v1667, 7
        %v1669 = vsub.s32 2, %v1668
        %v1670 = vrot.slane %v562, %v1669
        %v1671 = vlaneseq
        %v1672 = vshrl.u32 %v1671, 7
        %v1673 = vsub.s32 3, %v1672
        %v1674 = vrot.slane %v562, %v1673
        %v1711 = vunpack.c.l.b16 %v1626
        %v1712 = vunpack.c.h.b16 %v1626
        %v1713 = vunpack.c.l.b16 %v1627
        %v1714 = vunpack.c.h.b16 %v1627
        %v1715 = vunpack.c.l.b16 %v1628
        %v1716 = vunpack.c.h.b16 %v1628
        %v1717 = vunpack.c.l.b16 %v1629
        %v1718 = vunpack.c.h.b16 %v1629
        %v1719 = vunpack.c.l.b16 %v1630
        %v1720 = vunpack.c.h.b16 %v1630
        %v1721 = vunpack.c.l.b16 %v1631
        %v1722 = vunpack.c.h.b16 %v1631
        %v1723 = vunpack.c.l.b16 %v1632
        %v1724 = vunpack.c.h.b16 %v1632
        %v1725 = vunpack.c.l.b16 %v1633
        %v1726 = vunpack.c.h.b16 %v1633
        %v1727 = vunpack.c.l.b16 %v1634
        %v1728 = vunpack.c.h.b16 %v1634
        %v1729 = vunpack.c.l.b16 %v1635
        %v1730 = vunpack.c.h.b16 %v1635
        %v1731 = vunpack.c.l.b16 %v1636
        %v1732 = vunpack.c.h.b16 %v1636
        %v1733 = vunpack.c.l.b16 %v1637
        %v1734 = vunpack.c.h.b16 %v1637
        %v1735 = vunpack.c.l.b16 %v1638
        %v1736 = vunpack.c.h.b16 %v1638
        %v1737 = vunpack.c.l.b16 %v1639
        %v1738 = vunpack.c.h.b16 %v1639
        %v1739 = vunpack.c.l.b16 %v1640
        %v1740 = vunpack.c.h.b16 %v1640
        %v1741 = vunpack.c.l.b16 %v1641
        %v1742 = vunpack.c.h.b16 %v1641
        %v1743 = vunpack.c.l.b16 %v1642
        %v1744 = vunpack.c.h.b16 %v1642
        %v1745 = vunpack.c.l.b16 %v1643
        %v1746 = vunpack.c.h.b16 %v1643
        %v1747 = vunpack.c.l.b16 %v1644
        %v1748 = vunpack.c.h.b16 %v1644
        %v1749 = vunpack.c.l.b16 %v1645
        %v1750 = vunpack.c.h.b16 %v1645
        %v1751 = vunpack.c.l.b16 %v1646
        %v1752 = vunpack.c.h.b16 %v1646
        %v1753 = vunpack.c.l.b16 %v1647
        %v1754 = vunpack.c.h.b16 %v1647
        %v1755 = vunpack.c.l.b16 %v1648
        %v1756 = vunpack.c.h.b16 %v1648
        %v1757 = vunpack.c.l.b16 %v1649
        %v1758 = vunpack.c.h.b16 %v1649
        %v1759 = vunpack.c.l.b16 %v1650
        %v1760 = vunpack.c.h.b16 %v1650
        %v1761 = vunpack.c.l.b16 %v1651
        %v1762 = vunpack.c.h.b16 %v1651
        %v1763 = vunpack.c.l.b16 %v1652
        %v1764 = vunpack.c.h.b16 %v1652
        %v1765 = vunpack.c.l.b16 %v1653
        %v1766 = vunpack.c.h.b16 %v1653
        %v1767 = vunpack.c.l.b16 %v1654
        %v1768 = vunpack.c.h.b16 %v1654
        %v1769 = vunpack.c.l.b16 %v1655
        %v1770 = vunpack.c.h.b16 %v1655
        %v1771 = vunpack.c.l.b16 %v1656
        %v1772 = vunpack.c.h.b16 %v1656
        %v1773 = vunpack.c.l.b16 %v1657
        %v1774 = vunpack.c.h.b16 %v1657
        %v1775 = vpack.c.b16 %v1715, %v1711
        %v1776 = vpack.c.b16 %v1716, %v1712
        %v1777 = vpack.c.b16 %v1717, %v1713
        %v1778 = vpack.c.b16 %v1718, %v1714
        %v1779 = vpack.c.b16 %v1723, %v1719
        %v1780 = vpack.c.b16 %v1724, %v1720
        %v1781 = vpack.c.b16 %v1725, %v1721
        %v1782 = vpack.c.b16 %v1726, %v1722
        %v1783 = vpack.c.b16 %v1731, %v1727
        %v1784 = vpack.c.b16 %v1732, %v1728
        %v1785 = vpack.c.b16 %v1733, %v1729
        %v1786 = vpack.c.b16 %v1734, %v1730
        %v1787 = vpack.c.b16 %v1739, %v1735
        %v1788 = vpack.c.b16 %v1740, %v1736
        %v1789 = vpack.c.b16 %v1741, %v1737
        %v1790 = vpack.c.b16 %v1742, %v1738
        %v1791 = vpack.c.b16 %v1747, %v1743
        %v1792 = vpack.c.b16 %v1748, %v1744
        %v1793 = vpack.c.b16 %v1749, %v1745
        %v1794 = vpack.c.b16 %v1750, %v1746
        %v1795 = vpack.c.b16 %v1755, %v1751
        %v1796 = vpack.c.b16 %v1756, %v1752
        %v1797 = vpack.c.b16 %v1757, %v1753
        %v1798 = vpack.c.b16 %v1758, %v1754
        %v1799 = vpack.c.b16 %v1763, %v1759
        %v1800 = vpack.c.b16 %v1764, %v1760
        %v1801 = vpack.c.b16 %v1765, %v1761
        %v1802 = vpack.c.b16 %v1766, %v1762
        %v1803 = vpack.c.b16 %v1771, %v1767
        %v1804 = vpack.c.b16 %v1772, %v1768
        %v1805 = vpack.c.b16 %v1773, %v1769
        %v1806 = vpack.c.b16 %v1774, %v1770
        %1839 = vmatprep.subr.bf16.mxu0 %v1776
        %1840 = vmatpush1.bf16.msra.mxu0 %v1775
        %1841 = vmatprep.subr.bf16.mxu0 %v1780
        %1842 = vmatpush1.bf16.msra.mxu0 %v1779
        %1843 = vmatprep.subr.bf16.mxu0 %v1784
        %1844 = vmatpush1.bf16.msra.mxu0 %v1783
        %1845 = vmatprep.subr.bf16.mxu0 %v1788
        %1846 = vmatpush1.bf16.msra.mxu0 %v1787
        %1847 = vmatprep.subr.bf16.mxu0 %v1792
        %1848 = vmatpush1.bf16.msra.mxu0 %v1791
        %1849 = vmatprep.subr.bf16.mxu0 %v1796
        %1850 = vmatpush1.bf16.msra.mxu0 %v1795
        %1851 = vmatprep.subr.bf16.mxu0 %v1800
        %1852 = vmatpush1.bf16.msra.mxu0 %v1799
        %1853 = vmatprep.subr.bf16.mxu0 %v1804
        %1854 = vmatpush1.bf16.msra.mxu0 %v1803
        %1855 = vmatprep.subr.bf16.mxu0 0
        %1856 = vmatpush1.bf16.msra.mxu0 0
        %1857 = vmatprep.subr.bf16.mxu0 0
        %1858 = vmatpush1.bf16.msra.mxu0 0
        %1859 = vmatprep.subr.bf16.mxu0 0
        %1860 = vmatpush1.bf16.msra.mxu0 0
        %1861 = vmatprep.subr.bf16.mxu0 0
        %1862 = vmatpush1.bf16.msra.mxu0 0
        %1863 = vmatprep.subr.bf16.mxu0 0
        %1864 = vmatpush1.bf16.msra.mxu0 0
        %1865 = vmatprep.subr.bf16.mxu0 0
        %1866 = vmatpush1.bf16.msra.mxu0 0
        %1867 = vmatprep.subr.bf16.mxu0 0
        %1868 = vmatpush1.bf16.msra.mxu0 0
        %1869 = vmatprep.subr.bf16.mxu0 0
        %1870 = vmatpush1.bf16.msra.mxu0 0
        %1871 = vmatprep.mubr.bf16.mxu0 0
        %1872 = vmatmul.mubr.bf16.gmra.mrb[0].mxu0 %v1625
        %v1873 = vpop.f32.mrb[0].mxu0
        %v1874 = vadd.f32 %v1662, %v1873
        %v1875 = vpop.f32.mrb[0].mxu0
        %v1876 = vadd.f32 %v1666, %v1875
        %v1877 = vpop.f32.mrb[0].mxu0
        %v1878 = vadd.f32 %v1662, %v1877
        %v1879 = vpop.f32.mrb[0].mxu0
        %v1880 = vadd.f32 %v1666, %v1879
        %1881 = vdwg.mxu0
        %1882 = vmatprep.subr.bf16.mxu0 %v1778
        %1883 = vmatpush1.bf16.msra.mxu0 %v1777
        %1884 = vmatprep.subr.bf16.mxu0 %v1782
        %1885 = vmatpush1.bf16.msra.mxu0 %v1781
        %1886 = vmatprep.subr.bf16.mxu0 %v1786
        %1887 = vmatpush1.bf16.msra.mxu0 %v1785
        %1888 = vmatprep.subr.bf16.mxu0 %v1790
        %1889 = vmatpush1.bf16.msra.mxu0 %v1789
        %1890 = vmatprep.subr.bf16.mxu0 %v1794
        %1891 = vmatpush1.bf16.msra.mxu0 %v1793
        %1892 = vmatprep.subr.bf16.mxu0 %v1798
        %1893 = vmatpush1.bf16.msra.mxu0 %v1797
        %1894 = vmatprep.subr.bf16.mxu0 %v1802
        %1895 = vmatpush1.bf16.msra.mxu0 %v1801
        %1896 = vmatprep.subr.bf16.mxu0 %v1806
        %1897 = vmatpush1.bf16.msra.mxu0 %v1805
        %1898 = vmatprep.subr.bf16.mxu0 0
        %1899 = vmatpush1.bf16.msra.mxu0 0
        %1900 = vmatprep.subr.bf16.mxu0 0
        %1901 = vmatpush1.bf16.msra.mxu0 0
        %1902 = vmatprep.subr.bf16.mxu0 0
        %1903 = vmatpush1.bf16.msra.mxu0 0
        %1904 = vmatprep.subr.bf16.mxu0 0
        %1905 = vmatpush1.bf16.msra.mxu0 0
        %1906 = vmatprep.subr.bf16.mxu0 0
        %1907 = vmatpush1.bf16.msra.mxu0 0
        %1908 = vmatprep.subr.bf16.mxu0 0
        %1909 = vmatpush1.bf16.msra.mxu0 0
        %1910 = vmatprep.subr.bf16.mxu0 0
        %1911 = vmatpush1.bf16.msra.mxu0 0
        %1912 = vmatprep.subr.bf16.mxu0 0
        %1913 = vmatpush1.bf16.msra.mxu0 0
        %1914 = vmatprep.mubr.bf16.mxu0 0
        %1915 = vmatmul.mubr.bf16.gmra.mrb[0].mxu0 %v1625
        %v1916 = vpop.f32.mrb[0].mxu0
        %v1917 = vadd.f32 %v1670, %v1916
        %v1918 = vpop.f32.mrb[0].mxu0
        %v1919 = vadd.f32 %v1674, %v1918
        %v1920 = vpop.f32.mrb[0].mxu0
        %v1921 = vadd.f32 %v1670, %v1920
        %v1922 = vpop.f32.mrb[0].mxu0
        %v1923 = vadd.f32 %v1674, %v1922
        %1924 = vdwg.mxu0
        %v1925 = vmax.f32 %v1874, 0.0
        %v1926 = vmax.f32 %v1876, 0.0
        %v1927 = vmax.f32 %v1917, 0.0
        %v1928 = vmax.f32 %v1919, 0.0
        %v1929 = vmax.f32 %v1878, 0.0
        %v1930 = vmax.f32 %v1880, 0.0
        %v1931 = vmax.f32 %v1921, 0.0
        %v1932 = vmax.f32 %v1923, 0.0
        %v1933 = vpack.c.bf16 %v1929, %v1925
        %v1934 = vpack.c.bf16 %v1930, %v1926
        %v1935 = vpack.c.bf16 %v1931, %v1927
        %v1936 = vpack.c.bf16 %v1932, %v1928
        %v1937 = vld [vmem:[%s484] sm:$0xf]
        %v1938 = vld [vmem:[%s484 + $0x4] sm:$0xf]
        %v1939 = vld [vmem:[%s484 + $0x8] sm:$0xf]
        %v1940 = vld [vmem:[%s484 + $0xc] sm:$0xf]
        %v1941 = vld [vmem:[%s484 + $0x10] sm:$0xf]
        %v1942 = vld [vmem:[%s484 + $0x14] sm:$0xf]
        %v1943 = vld [vmem:[%s484 + $0x18] sm:$0xf]
        %v1944 = vld [vmem:[%s484 + $0x1c] sm:$0xf]
        %v1945 = vld [vmem:[%s484 + $0x20] sm:$0xf]
        %v1946 = vld [vmem:[%s484 + $0x24] sm:$0xf]
        %v1947 = vld [vmem:[%s484 + $0x28] sm:$0xf]
        %v1948 = vld [vmem:[%s484 + $0x2c] sm:$0xf]
        %v1949 = vld [vmem:[%s484 + $0x30] sm:$0xf]
        %v1950 = vld [vmem:[%s484 + $0x34] sm:$0xf]
        %v1951 = vld [vmem:[%s484 + $0x38] sm:$0xf]
        %v1952 = vld [vmem:[%s484 + $0x3c] sm:$0xf]
        %v1953 = vld [vmem:[%s484 + $0x40] sm:$0xf]
        %v1954 = vld [vmem:[%s484 + $0x44] sm:$0xf]
        %v1955 = vld [vmem:[%s484 + $0x48] sm:$0xf]
        %v1956 = vld [vmem:[%s484 + $0x4c] sm:$0xf]
        %v1957 = vld [vmem:[%s484 + $0x50] sm:$0xf]
        %v1958 = vld [vmem:[%s484 + $0x54] sm:$0xf]
        %v1959 = vld [vmem:[%s484 + $0x58] sm:$0xf]
        %v1960 = vld [vmem:[%s484 + $0x5c] sm:$0xf]
        %v1961 = vld [vmem:[%s484 + $0x60] sm:$0xf]
        %v1962 = vld [vmem:[%s484 + $0x64] sm:$0xf]
        %v1963 = vld [vmem:[%s484 + $0x68] sm:$0xf]
        %v1964 = vld [vmem:[%s484 + $0x6c] sm:$0xf]
        %v1965 = vld [vmem:[%s484 + $0x70] sm:$0xf]
        %v1966 = vld [vmem:[%s484 + $0x74] sm:$0xf]
        %v1967 = vld [vmem:[%s484 + $0x78] sm:$0xf]
        %v1968 = vld [vmem:[%s484 + $0x7c] sm:$0xf]
        %v1969 = vld [vmem:[%s484 + $0x80] sm:$0xf]
        %v1970 = vld [vmem:[%s484 + $0x84] sm:$0xf]
        %v1971 = vld [vmem:[%s484 + $0x88] sm:$0xf]
        %v1972 = vld [vmem:[%s484 + $0x8c] sm:$0xf]
        %v1973 = vld [vmem:[%s484 + $0x90] sm:$0xf]
        %v1974 = vld [vmem:[%s484 + $0x94] sm:$0xf]
        %v1975 = vld [vmem:[%s484 + $0x98] sm:$0xf]
        %v1976 = vld [vmem:[%s484 + $0x9c] sm:$0xf]
        %v1977 = vld [vmem:[%s484 + $0xa0] sm:$0xf]
        %v1978 = vld [vmem:[%s484 + $0xa4] sm:$0xf]
        %v1979 = vld [vmem:[%s484 + $0xa8] sm:$0xf]
        %v1980 = vld [vmem:[%s484 + $0xac] sm:$0xf]
        %v1981 = vld [vmem:[%s484 + $0xb0] sm:$0xf]
        %v1982 = vld [vmem:[%s484 + $0xb4] sm:$0xf]
        %v1983 = vld [vmem:[%s484 + $0xb8] sm:$0xf]
        %v1984 = vld [vmem:[%s484 + $0xbc] sm:$0xf]
        %v1985 = vld [vmem:[%s484 + $0xc0] sm:$0xf]
        %v1986 = vld [vmem:[%s484 + $0xc4] sm:$0xf]
        %v1987 = vld [vmem:[%s484 + $0xc8] sm:$0xf]
        %v1988 = vld [vmem:[%s484 + $0xcc] sm:$0xf]
        %v1989 = vld [vmem:[%s484 + $0xd0] sm:$0xf]
        %v1990 = vld [vmem:[%s484 + $0xd4] sm:$0xf]
        %v1991 = vld [vmem:[%s484 + $0xd8] sm:$0xf]
        %v1992 = vld [vmem:[%s484 + $0xdc] sm:$0xf]
        %v1993 = vld [vmem:[%s484 + $0xe0] sm:$0xf]
        %v1994 = vld [vmem:[%s484 + $0xe4] sm:$0xf]
        %v1995 = vld [vmem:[%s484 + $0xe8] sm:$0xf]
        %v1996 = vld [vmem:[%s484 + $0xec] sm:$0xf]
        %v1997 = vld [vmem:[%s484 + $0xf0] sm:$0xf]
        %v1998 = vld [vmem:[%s484 + $0xf4] sm:$0xf]
        %v1999 = vld [vmem:[%s484 + $0xf8] sm:$0xf]
        %v2000 = vld [vmem:[%s484 + $0xfc] sm:$0xf]
        %v2001 = vlaneseq
        %v2002 = vshrl.u32 %v2001, 7
        %v2003 = vsub.s32 5, %v2002
        %v2004 = vrot.slane %v561, %v2003
        %v2069 = vunpack.c.l.b16 %v1937
        %v2070 = vunpack.c.l.b16 %v1938
        %v2071 = vunpack.c.l.b16 %v1939
        %v2072 = vunpack.c.l.b16 %v1940
        %v2073 = vunpack.c.l.b16 %v1941
        %v2074 = vunpack.c.l.b16 %v1942
        %v2075 = vunpack.c.l.b16 %v1943
        %v2076 = vunpack.c.l.b16 %v1944
        %v2077 = vunpack.c.l.b16 %v1945
        %v2078 = vunpack.c.l.b16 %v1946
        %v2079 = vunpack.c.l.b16 %v1947
        %v2080 = vunpack.c.l.b16 %v1948
        %v2081 = vunpack.c.l.b16 %v1949
        %v2082 = vunpack.c.l.b16 %v1950
        %v2083 = vunpack.c.l.b16 %v1951
        %v2084 = vunpack.c.l.b16 %v1952
        %v2085 = vunpack.c.l.b16 %v1953
        %v2086 = vunpack.c.l.b16 %v1954
        %v2087 = vunpack.c.l.b16 %v1955
        %v2088 = vunpack.c.l.b16 %v1956
        %v2089 = vunpack.c.l.b16 %v1957
        %v2090 = vunpack.c.l.b16 %v1958
        %v2091 = vunpack.c.l.b16 %v1959
        %v2092 = vunpack.c.l.b16 %v1960
        %v2093 = vunpack.c.l.b16 %v1961
        %v2094 = vunpack.c.l.b16 %v1962
        %v2095 = vunpack.c.l.b16 %v1963
        %v2096 = vunpack.c.l.b16 %v1964
        %v2097 = vunpack.c.l.b16 %v1965
        %v2098 = vunpack.c.l.b16 %v1966
        %v2099 = vunpack.c.l.b16 %v1967
        %v2100 = vunpack.c.l.b16 %v1968
        %v2101 = vunpack.c.l.b16 %v1969
        %v2102 = vunpack.c.l.b16 %v1970
        %v2103 = vunpack.c.l.b16 %v1971
        %v2104 = vunpack.c.l.b16 %v1972
        %v2105 = vunpack.c.l.b16 %v1973
        %v2106 = vunpack.c.l.b16 %v1974
        %v2107 = vunpack.c.l.b16 %v1975
        %v2108 = vunpack.c.l.b16 %v1976
        %v2109 = vunpack.c.l.b16 %v1977
        %v2110 = vunpack.c.l.b16 %v1978
        %v2111 = vunpack.c.l.b16 %v1979
        %v2112 = vunpack.c.l.b16 %v1980
        %v2113 = vunpack.c.l.b16 %v1981
        %v2114 = vunpack.c.l.b16 %v1982
        %v2115 = vunpack.c.l.b16 %v1983
        %v2116 = vunpack.c.l.b16 %v1984
        %v2117 = vunpack.c.l.b16 %v1985
        %v2118 = vunpack.c.l.b16 %v1986
        %v2119 = vunpack.c.l.b16 %v1987
        %v2120 = vunpack.c.l.b16 %v1988
        %v2121 = vunpack.c.l.b16 %v1989
        %v2122 = vunpack.c.l.b16 %v1990
        %v2123 = vunpack.c.l.b16 %v1991
        %v2124 = vunpack.c.l.b16 %v1992
        %v2125 = vunpack.c.l.b16 %v1993
        %v2126 = vunpack.c.l.b16 %v1994
        %v2127 = vunpack.c.l.b16 %v1995
        %v2128 = vunpack.c.l.b16 %v1996
        %v2129 = vunpack.c.l.b16 %v1997
        %v2130 = vunpack.c.l.b16 %v1998
        %v2131 = vunpack.c.l.b16 %v1999
        %v2132 = vunpack.c.l.b16 %v2000
        %v2133 = vpack.c.b16 %v2070, %v2069
        %v2134 = vpack.c.b16 %v2072, %v2071
        %v2135 = vpack.c.b16 %v2074, %v2073
        %v2136 = vpack.c.b16 %v2076, %v2075
        %v2137 = vpack.c.b16 %v2078, %v2077
        %v2138 = vpack.c.b16 %v2080, %v2079
        %v2139 = vpack.c.b16 %v2082, %v2081
        %v2140 = vpack.c.b16 %v2084, %v2083
        %v2141 = vpack.c.b16 %v2086, %v2085
        %v2142 = vpack.c.b16 %v2088, %v2087
        %v2143 = vpack.c.b16 %v2090, %v2089
        %v2144 = vpack.c.b16 %v2092, %v2091
        %v2145 = vpack.c.b16 %v2094, %v2093
        %v2146 = vpack.c.b16 %v2096, %v2095
        %v2147 = vpack.c.b16 %v2098, %v2097
        %v2148 = vpack.c.b16 %v2100, %v2099
        %v2149 = vpack.c.b16 %v2102, %v2101
        %v2150 = vpack.c.b16 %v2104, %v2103
        %v2151 = vpack.c.b16 %v2106, %v2105
        %v2152 = vpack.c.b16 %v2108, %v2107
        %v2153 = vpack.c.b16 %v2110, %v2109
        %v2154 = vpack.c.b16 %v2112, %v2111
        %v2155 = vpack.c.b16 %v2114, %v2113
        %v2156 = vpack.c.b16 %v2116, %v2115
        %v2157 = vpack.c.b16 %v2118, %v2117
        %v2158 = vpack.c.b16 %v2120, %v2119
        %v2159 = vpack.c.b16 %v2122, %v2121
        %v2160 = vpack.c.b16 %v2124, %v2123
        %v2161 = vpack.c.b16 %v2126, %v2125
        %v2162 = vpack.c.b16 %v2128, %v2127
        %v2163 = vpack.c.b16 %v2130, %v2129
        %v2164 = vpack.c.b16 %v2132, %v2131
        %2197 = vmatprep.subr.bf16.mxu0 0
        %2198 = vmatpush1.bf16.msra.mxu0 %v2133
        %2199 = vmatprep.subr.bf16.mxu0 0
        %2200 = vmatpush1.bf16.msra.mxu0 %v2134
        %2201 = vmatprep.subr.bf16.mxu0 0
        %2202 = vmatpush1.bf16.msra.mxu0 %v2135
        %2203 = vmatprep.subr.bf16.mxu0 0
        %2204 = vmatpush1.bf16.msra.mxu0 %v2136
        %2205 = vmatprep.subr.bf16.mxu0 0
        %2206 = vmatpush1.bf16.msra.mxu0 %v2137
        %2207 = vmatprep.subr.bf16.mxu0 0
        %2208 = vmatpush1.bf16.msra.mxu0 %v2138
        %2209 = vmatprep.subr.bf16.mxu0 0
        %2210 = vmatpush1.bf16.msra.mxu0 %v2139
        %2211 = vmatprep.subr.bf16.mxu0 0
        %2212 = vmatpush1.bf16.msra.mxu0 %v2140
        %2213 = vmatprep.subr.bf16.mxu0 0
        %2214 = vmatpush1.bf16.msra.mxu0 %v2141
        %2215 = vmatprep.subr.bf16.mxu0 0
        %2216 = vmatpush1.bf16.msra.mxu0 %v2142
        %2217 = vmatprep.subr.bf16.mxu0 0
        %2218 = vmatpush1.bf16.msra.mxu0 %v2143
        %2219 = vmatprep.subr.bf16.mxu0 0
        %2220 = vmatpush1.bf16.msra.mxu0 %v2144
        %2221 = vmatprep.subr.bf16.mxu0 0
        %2222 = vmatpush1.bf16.msra.mxu0 %v2145
        %2223 = vmatprep.subr.bf16.mxu0 0
        %2224 = vmatpush1.bf16.msra.mxu0 %v2146
        %2225 = vmatprep.subr.bf16.mxu0 0
        %2226 = vmatpush1.bf16.msra.mxu0 %v2147
        %2227 = vmatprep.subr.bf16.mxu0 0
        %2228 = vmatpush1.bf16.msra.mxu0 %v2148
        %2229 = vmatprep.mubr.bf16.mxu0 %v1934
        %2230 = vmatmul.mubr.bf16.gmra.mrb[0].mxu0 %v1933
        %v2231 = vpop.f32.mrb[0].mxu0
        %v2232 = vadd.f32 %v2004, %v2231
        %v2233 = vpop.f32.mrb[0].mxu0
        %v2234 = vpop.f32.mrb[0].mxu0
        %v2235 = vadd.f32 %v2004, %v2234
        %v2236 = vpop.f32.mrb[0].mxu0
        %2237 = vdwg.mxu0
        %2238 = vmatprep.subr.bf16.mxu0 0
        %2239 = vmatpush1.bf16.msra.mxu0 %v2149
        %2240 = vmatprep.subr.bf16.mxu0 0
        %2241 = vmatpush1.bf16.msra.mxu0 %v2150
        %2242 = vmatprep.subr.bf16.mxu0 0
        %2243 = vmatpush1.bf16.msra.mxu0 %v2151
        %2244 = vmatprep.subr.bf16.mxu0 0
        %2245 = vmatpush1.bf16.msra.mxu0 %v2152
        %2246 = vmatprep.subr.bf16.mxu0 0
        %2247 = vmatpush1.bf16.msra.mxu0 %v2153
        %2248 = vmatprep.subr.bf16.mxu0 0
        %2249 = vmatpush1.bf16.msra.mxu0 %v2154
        %2250 = vmatprep.subr.bf16.mxu0 0
        %2251 = vmatpush1.bf16.msra.mxu0 %v2155
        %2252 = vmatprep.subr.bf16.mxu0 0
        %2253 = vmatpush1.bf16.msra.mxu0 %v2156
        %2254 = vmatprep.subr.bf16.mxu0 0
        %2255 = vmatpush1.bf16.msra.mxu0 %v2157
        %2256 = vmatprep.subr.bf16.mxu0 0
        %2257 = vmatpush1.bf16.msra.mxu0 %v2158
        %2258 = vmatprep.subr.bf16.mxu0 0
        %2259 = vmatpush1.bf16.msra.mxu0 %v2159
        %2260 = vmatprep.subr.bf16.mxu0 0
        %2261 = vmatpush1.bf16.msra.mxu0 %v2160
        %2262 = vmatprep.subr.bf16.mxu0 0
        %2263 = vmatpush1.bf16.msra.mxu0 %v2161
        %2264 = vmatprep.subr.bf16.mxu0 0
        %2265 = vmatpush1.bf16.msra.mxu0 %v2162
        %2266 = vmatprep.subr.bf16.mxu0 0
        %2267 = vmatpush1.bf16.msra.mxu0 %v2163
        %2268 = vmatprep.subr.bf16.mxu0 0
        %2269 = vmatpush1.bf16.msra.mxu0 %v2164
        %2270 = vmatprep.mubr.bf16.mxu0 %v1936
        %2271 = vmatmul.mubr.bf16.gmra.mrb[0].mxu0 %v1935
        %v2272 = vpop.f32.mrb[0].mxu0
        %v2273 = vadd.f32 %v2232, %v2272
        %v2274 = vpop.f32.mrb[0].mxu0
        %v2275 = vpop.f32.mrb[0].mxu0
        %v2276 = vadd.f32 %v2235, %v2275
        %v2277 = vpop.f32.mrb[0].mxu0
        %2278 = vdwg.mxu0
        %v2279 = vadd.f32 %v1589, %v2273
        %v2280 = vadd.f32 %v1590, %v2276
        %2281 = vst [vmem:[#allocation2] sm:$0xff] %v2279
        %2282 = vst [vmem:[#allocation2 + $0x8] sm:$0xff] %v2280
        %p2283 = scmp.eq.s32.totalorder %s31, 1
        // Predicated region
        $region85: #{tpu_custom_call.1} parent=51 // pred_check
          %p2284 = pneg %p2283
        $region86: #{tpu_custom_call.1} parent=51 // pred_check_branch
          %2286 = sbr.rel (%p2284) target = $region88
        $region87: #{tpu_custom_call.1} parent=51 // pred_region
          %2287 = vst [vmem:[%s545] sm:$0xff] %v2279
          %2288 = vst [vmem:[%s545 + $0x8] sm:$0xff] %v2280
        $region88: #{tpu_custom_call.1} parent=51 // pred_fallthru
          _
        %s2289 = sand.u32 %s249, 1
        %s2290 = scalar_lea.sflag [#allocation5], %s2289
        %s2291 = sand.u32 %s249, 1
        %s2292 = smul.addr %s2291, 16
        %s2293 = scalar_lea.vmem [#allocation13], %s2292
        // Predicated region
        $region89: #{tpu_custom_call.1} parent=51 // pred_check
          %p2294 = pneg %p259
        $region90: #{tpu_custom_call.1} parent=51 // pred_check_branch
          %2296 = sbr.rel (%p2294) target = $region92
        $region91: #{tpu_custom_call.1} parent=51 // pred_region
          %s2298 = ssub.s32 256, 256
          %2299 = vsyncadd %s2290, %s2298
          %s2300 = smul.addr %s30, 2
          %s2301 = smul.addr %s2300, 128
          %s2302 = scalar_lea.hbm %s8, %s2301
          %s2303 = sshll.u32 %s2293, 4
          %s2304 = int_to_ptr.vmem [resolvable:$true] %s2303
          %2309 = dma.vmem_to_hbm [thread:$0]  %s2304, 256, %s2302, %s2290, 128, 128, 8
        $region92: #{tpu_custom_call.1} parent=51 // pred_fallthru
          _
      $region52: #{tpu_custom_call.1} parent=5 // pred_fallthru
        _
      %p2310 = scmp.le.s32.totalorder 2, %s21
      // Predicated region
      $region93: #{tpu_custom_call.1} parent=5 // pred_check
        %p2311 = pneg %p2310
      $region94: #{tpu_custom_call.1} parent=5 // pred_check_branch
        %2313 = sbr.rel (%p2311) target = $region96
      $region95: #{tpu_custom_call.1} parent=5 // pred_region
        %s2314 = ssub.s32 %s21, 2
        // Predicated region
        $region97: #{tpu_custom_call.1} parent=95 // pred_check
          %p2315 = pneg %p265
        $region98: #{tpu_custom_call.1} parent=95 // pred_check_branch
          %2317 = sbr.rel (%p2315) target = $region100
        $region99: #{tpu_custom_call.1} parent=95 // pred_region
          %s2318 = sand.u32 %s250, 1
          %s2319 = scalar_lea.sflag [#allocation5], %s2318
          %s2320 = sand.u32 %s250, 1
          %s2321 = smul.addr %s2320, 16
          %s2322 = scalar_lea.vmem [#allocation13], %s2321
          %2323 = dma.done %s2319, 256
        $region100: #{tpu_custom_call.1} parent=95 // pred_fallthru
          _
      $region96: #{tpu_custom_call.1} parent=5 // pred_fallthru
        _
    $region6: #{tpu_custom_call.1} parent=1 // loop_footer
      %s25 = sadd.s32 1, %s21
    $region7: #{tpu_custom_call.1} parent=1 // loop_footer_branch
      %20 = sbr.rel target = $region3
    $region8: #{tpu_custom_call.1} parent=1 // loop_exit
      _
    %2324 = vsyncpa [#allocation4], 1
    %s2325 = scalar_lea.sflag [#allocation4], 1
    %2326 = vsyncpa %s2325, 1
    %2327 = vsyncpa [#allocation7], 1
    %2328 = vsyncpa [#allocation5], 1
    %s2329 = scalar_lea.sflag [#allocation5], 1
    %2330 = vsyncpa %s2329, 1

</llo_original>
